<compile_context>
chip_gen: v7x
topology: tpu7x:2x2x1
jax: 0.10.0
libtpu: 0.0.40
codegen_flags: <defaults>
</compile_context>

<pallas_src>
import functools

import jax
import jax.numpy as jnp
from jax.experimental import pallas as pl
from jax.experimental.pallas import tpu as pltpu


def _round_up(x, m):
    return (x + m - 1) // m * m


# -----------------------------------------------------------------------------
# Fused Pallas kernel: input projection + LSTM recurrence + classifier
# -----------------------------------------------------------------------------
def _fused_lstm_kernel(x_ref, wih_ref, whh_ref, b_ref, clsw_ref, clsb_ref,
                       out_ref, gx_scr, *, T, B_pad, Hp):
    """Single invocation, everything resident in VMEM.

    x_ref    : (T*B_pad, Din_pad) bf16  time-major flattened input (zero padded)
    wih_ref  : (Din_pad, 4*Hp)    bf16  pre-transposed, gate-reordered (i,f,o,g),
                                        sigmoid blocks pre-scaled by 1/2
    whh_ref  : (Hp, 4*Hp)         bf16  same packing as wih_ref
    b_ref    : (1, 4*Hp)          f32   combined (b_ih + b_hh), same packing
    clsw_ref : (Hp, Cp)           bf16  pre-transposed classifier weight
    clsb_ref : (1, Cp)            f32   classifier bias
    out_ref  : (B_pad, Cp)        f32   logits for the final hidden state
    gx_scr   : (T*B_pad, 4*Hp)    f32   hoisted input projection (+ bias)
    """
    # ---- Prologue: one big bf16 MXU matmul for ALL timesteps, bias folded in.
    gx_scr[...] = (
        jnp.dot(x_ref[...], wih_ref[...], preferred_element_type=jnp.float32)
        + b_ref[...]
    )

    w_hh = whh_ref[...]                       # resident bf16 (Hp, 4Hp)

    # ---- Recurrence: only h_prev @ W_hh per step; h/c carried in f32 vregs.
    def step(t, carry):
        h_prev, c_prev = carry
        row = pl.multiple_of(t * B_pad, B_pad)       # sublane-aligned start
        gates = gx_scr[pl.ds(row, B_pad), :] + jnp.dot(
            h_prev.astype(jnp.bfloat16), w_hh,
            preferred_element_type=jnp.float32)      # (B_pad, 4Hp) f32

        # ONE wide EUP tanh over all 4 gate blocks.  The i/f/o blocks were
        # pre-scaled by 1/2 in the packed weights/bias, so
        #   sigmoid(orig) = 0.5 * tanh(orig/2) + 0.5 = 0.5 * t + 0.5
        # while the g block (unscaled) is plain tanh.
        t_act = jnp.tanh(gates)
        i_g = 0.5 * t_act[:, 0 * Hp:1 * Hp] + 0.5
        f_g = 0.5 * t_act[:, 1 * Hp:2 * Hp] + 0.5
        o_g = 0.5 * t_act[:, 2 * Hp:3 * Hp] + 0.5
        g_g = t_act[:, 3 * Hp:4 * Hp]

        c_new = f_g * c_prev + i_g * g_g
        h_new = o_g * jnp.tanh(c_new)
        return h_new, c_new

    h0 = jnp.zeros((B_pad, Hp), jnp.float32)
    c0 = jnp.zeros((B_pad, Hp), jnp.float32)
    # Bounded unroll: full unroll keeps slice indices static for short
    # sequences; partial unroll avoids vreg spills / code blow-up for long T.
    unroll = True if T <= 32 else 8
    h_T, _ = jax.lax.fori_loop(0, T, step, (h0, c0), unroll=unroll)

    # ---- Epilogue: fused classifier on the final hidden state only.
    out_ref[...] = (
        jnp.dot(h_T.astype(jnp.bfloat16), clsw_ref[...],
                preferred_element_type=jnp.float32)
        + clsb_ref[...]
    ).astype(out_ref.dtype)


# -----------------------------------------------------------------------------
# Wrapper (layout plumbing: transpose / pad / reorder / scale weights, 1 call)
# -----------------------------------------------------------------------------
def lstm_v1_forward(x0, params):
    """Mirrors LSTMV1.forward.

    x0: (B, C, Hsp, W) NCHW.  As in PyTorch: view(B, -1, W).permute(0, 2, 1)
    -> sequence of length W with feature dim C*Hsp.  The module's per-timestep
    loop (seq length 1 each call) yields lstm_out_a_ == final hidden state h_T,
    so lstm_out_a_.sum(1) == h_T; the classifier maps it to (B, num_classes).
    Returns (x_out_base, action_all_base == []).
    """
    B, C, Hsp, W = x0.shape
    T, Din = W, C * Hsp

    w_ih = params["w_ih"]                    # (4H, Din)   PyTorch weight_ih_l0
    w_hh = params["w_hh"]                    # (4H, H)     PyTorch weight_hh_l0
    bias = params["b_ih"] + params["b_hh"]   # (4H,)
    cls_w = params["cls_w"]                  # (NC, H)
    cls_b = params["cls_b"]                  # (NC,)
    H = w_hh.shape[1]
    NC = cls_w.shape[0]

    # Padded, TPU-aligned shapes.
    B_pad = _round_up(B, 8)            # sublane
    Din_pad = _round_up(Din, 128)      # lane
    Hp = _round_up(H, 128)             # lane (also aligns gate slices)
    Cp = _round_up(NC, 128)            # lane

    # Single combined transpose to time-major (T, B, Din), then pad + flatten.
    x = jnp.transpose(x0.reshape(B, Din, T), (2, 0, 1)).astype(jnp.float32)
    x = jnp.pad(x, ((0, 0), (0, B_pad - B), (0, Din_pad - Din)))
    x_flat = x.reshape(T * B_pad, Din_pad).astype(jnp.bfloat16)

    # Gate reorder: PyTorch (i, f, g, o) -> kernel (i, f, o, g) so all sigmoid
    # gates are contiguous; sigmoid blocks are pre-scaled by 1/2 so a single
    # in-kernel tanh over 4*Hp lanes produces every activation.
    gate_perm = jnp.array([0, 1, 3, 2], jnp.int32)
    sig_scale = jnp.array([0.5, 0.5, 0.5, 1.0], jnp.float32)  # i, f, o, g

    def pack_gate_w(w, in_dim, in_pad):
        # (4H, in_dim) PyTorch layout -> (in_pad, 4*Hp): reorder gates, fold
        # the sigmoid 1/2 pre-scale, pad each gate block to Hp lanes, transpose
        # so the kernel needs no in-kernel `.T`.
        w4 = w.reshape(4, H, in_dim)[gate_perm] * sig_scale[:, None, None]
        w4 = jnp.pad(w4, ((0, 0), (0, Hp - H), (0, in_pad - in_dim)))
        return jnp.transpose(w4, (2, 0, 1)).reshape(in_pad, 4 * Hp)

    wih_t = pack_gate_w(w_ih, Din, Din_pad).astype(jnp.bfloat16)  # (Din_pad,4Hp)
    whh_t = pack_gate_w(w_hh, H, Hp).astype(jnp.bfloat16)         # (Hp, 4Hp)
    b4 = bias.reshape(4, H)[gate_perm] * sig_scale[:, None]
    b4 = jnp.pad(b4, ((0, 0), (0, Hp - H))).reshape(1, 4 * Hp)    # f32
    clsw_t = jnp.pad(cls_w.T, ((0, Hp - H), (0, Cp - NC))).astype(jnp.bfloat16)
    clsb = jnp.pad(cls_b, (0, Cp - NC)).reshape(1, Cp)            # f32

    # VMEM budget: size the scoped limit from the real footprint (with
    # double-buffer headroom) so large T does not trip v5e's 16 MiB default;
    # cap well under the v7x 64 MiB physical budget.
    footprint = (
        T * B_pad * Din_pad * 2            # x (bf16)
        + Din_pad * 4 * Hp * 2             # W_ih (bf16)
        + Hp * 4 * Hp * 2                  # W_hh (bf16)
        + 4 * Hp * 4                       # bias (f32)
        + Hp * Cp * 2 + Cp * 4             # classifier (bf16 / f32)
        + B_pad * Cp * 4                   # out (f32)
        + T * B_pad * 4 * Hp * 4           # gx scratch (f32)
    )
    vmem_limit = int(min(max(2 * footprint + (2 << 20), 16 << 20), 48 << 20))

    kernel = functools.partial(_fused_lstm_kernel, T=T, B_pad=B_pad, Hp=Hp)

    out_padded = pl.pallas_call(
        kernel,
        out_shape=jax.ShapeDtypeStruct((B_pad, Cp), jnp.float32),
        in_specs=[
            pl.BlockSpec((T * B_pad, Din_pad), lambda: (0, 0)),
            pl.BlockSpec((Din_pad, 4 * Hp), lambda: (0, 0)),
            pl.BlockSpec((Hp, 4 * Hp), lambda: (0, 0)),
            pl.BlockSpec((1, 4 * Hp), lambda: (0, 0)),
            pl.BlockSpec((Hp, Cp), lambda: (0, 0)),
            pl.BlockSpec((1, Cp), lambda: (0, 0)),
        ],
        out_specs=pl.BlockSpec((B_pad, Cp), lambda: (0, 0)),
        scratch_shapes=[
            pltpu.VMEM((T * B_pad, 4 * Hp), jnp.float32),   # hoisted x-projection
        ],
        compiler_params=pltpu.CompilerParams(vmem_limit_bytes=vmem_limit),
    )(x_flat, wih_t, whh_t, b4, clsw_t, clsb)

    x_out_base = out_padded[:B, :NC]
    action_all_base = []   # matches the module (never populated in forward)
    return x_out_base, action_all_base


# -----------------------------------------------------------------------------
# Pure-JAX reference (for a correctness sanity check)
# -----------------------------------------------------------------------------
def lstm_v1_reference(x0, params):
    B, C, Hsp, W = x0.shape
    x = jnp.transpose(x0.reshape(B, C * Hsp, W), (0, 2, 1))  # (B, T, Din)
    w_ih, w_hh = params["w_ih"], params["w_hh"]
    b = params["b_ih"] + params["b_hh"]
    H = w_hh.shape[1]
    hp = jax.lax.Precision.HIGHEST

    def step(carry, x_t):
        h, c = carry
        gates = (jnp.dot(x_t, w_ih.T, precision=hp)
                 + jnp.dot(h, w_hh.T, precision=hp) + b)
        i = jax.nn.sigmoid(gates[:, 0 * H:1 * H])
        f = jax.nn.sigmoid(gates[:, 1 * H:2 * H])
        g = jnp.tanh(gates[:, 2 * H:3 * H])
        o = jax.nn.sigmoid(gates[:, 3 * H:4 * H])
        c = f * c + i * g
        h = o * jnp.tanh(c)
        return (h, c), None

    h0 = jnp.zeros((B, H), jnp.float32)
    c0 = jnp.zeros((B, H), jnp.float32)
    (h_T, _), _ = jax.lax.scan(step, (h0, c0), jnp.transpose(x, (1, 0, 2)))
    return jnp.dot(h_T, params["cls_w"].T, precision=hp) + params["cls_b"]


# -----------------------------------------------------------------------------
# Deterministic PyTorch-style parameter init
# -----------------------------------------------------------------------------
def init_params(key, dim_fc, hidden_dim, num_classes):
    k = 1.0 / jnp.sqrt(hidden_dim)
    key, k1, k2, k3, k4, k5, k6 = jax.random.split(key, 7)
    return {
        "w_ih": jax.random.uniform(k1, (4 * hidden_dim, dim_fc), jnp.float32, -k, k),
        "w_hh": jax.random.uniform(k2, (4 * hidden_dim, hidden_dim), jnp.float32, -k, k),
        "b_ih": jax.random.uniform(k3, (4 * hidden_dim,), jnp.float32, -k, k),
        "b_hh": jax.random.uniform(k4, (4 * hidden_dim,), jnp.float32, -k, k),
        "cls_w": jax.random.uniform(k5, (num_classes, hidden_dim), jnp.float32, -k, k),
        "cls_b": jax.random.uniform(k6, (num_classes,), jnp.float32, -k, k),
    }


# -----------------------------------------------------------------------------
if __name__ == "__main__":
    # Small shapes implied by the module's forward:
    #   x0 NCHW = (B, C, Hsp, W); LSTM feature dim is C*Hsp == dim_fc,
    #   sequence length is W; hidden_dim1 == hidden_dim2 (required by the
    #   module for the classifier to consume the LSTM output).
    B, C, HSP, W = 2, 4, 16, 8          # dim_fc = 64, seq_len = 8
    DIM_FC = C * HSP
    HIDDEN = 32                          # hidden_dim1 == hidden_dim2
    NUM_CLASSES = 10

    key = jax.random.PRNGKey(0)
    key, kx = jax.random.split(key)
    x0 = jax.random.normal(kx, (B, C, HSP, W), jnp.float32)

    params = init_params(key, DIM_FC, HIDDEN, NUM_CLASSES)

    out, action_all = lstm_v1_forward(x0, params)
    out = jax.block_until_ready(out)

    assert out.shape == (B, NUM_CLASSES)
    assert action_all == []

    ref = jax.block_until_ready(lstm_v1_reference(x0, params))
    max_diff = float(jnp.max(jnp.abs(out - ref)))
    # Tolerance reflects bf16 MXU operands (f32 accumulation, f32 gate math)
    # vs an all-f32 HIGHEST-precision reference.
    assert jnp.allclose(out, ref, atol=2e-2, rtol=2e-2), (
        f"max abs diff {max_diff}")

    print("KERNEL_OK")
</pallas_src>

<mosaic_0001>
module attributes {stable_mosaic.version = 11 : i64} {
  func.func @_fused_lstm_kernel(%arg0: memref<64x128xbf16, #tpu.memory_space<vmem>>, %arg1: memref<128x512xbf16, #tpu.memory_space<vmem>>, %arg2: memref<128x512xbf16, #tpu.memory_space<vmem>>, %arg3: memref<1x512xf32, #tpu.memory_space<vmem>>, %arg4: memref<128x128xbf16, #tpu.memory_space<vmem>>, %arg5: memref<1x128xf32, #tpu.memory_space<vmem>>, %arg6: memref<8x128xf32, #tpu.memory_space<vmem>>, %arg7: memref<64x512xf32, #tpu.memory_space<vmem>>) attributes {dimension_semantics = [], scalar_prefetch = 0 : i64, scratch_operands = 1 : i64, tpu.core_type = #tpu.core_type<tc>} {
    %c0 = arith.constant 0 : index
    %c0_0 = arith.constant 0 : index
    %0 = vector.load %arg0[%c0, %c0_0] : memref<64x128xbf16, #tpu.memory_space<vmem>>, vector<64x128xbf16>
    %c0_1 = arith.constant 0 : index
    %c0_2 = arith.constant 0 : index
    %1 = vector.load %arg1[%c0_1, %c0_2] : memref<128x512xbf16, #tpu.memory_space<vmem>>, vector<128x512xbf16>
    %cst = arith.constant dense<0.000000e+00> : vector<64x512xf32>
    %2 = tpu.matmul %0, %1, %cst {dimension_numbers = #tpu.dot_dimension_numbers<[1], [0], [0], [1], [0, 0, 1, 1], [], []>} : vector<64x128xbf16>, vector<128x512xbf16>, vector<64x512xf32> -> vector<64x512xf32>
    %c0_3 = arith.constant 0 : index
    %c0_4 = arith.constant 0 : index
    %3 = vector.load %arg3[%c0_3, %c0_4] : memref<1x512xf32, #tpu.memory_space<vmem>>, vector<1x512xf32>
    %4 = vector.broadcast %3 : vector<1x512xf32> to vector<64x512xf32>
    %5 = arith.addf %2, %4 : vector<64x512xf32>
    %c0_5 = arith.constant 0 : index
    %c0_6 = arith.constant 0 : index
    %6 = vector.load %arg7[%c0_5, %c0_6] : memref<64x512xf32, #tpu.memory_space<vmem>>, vector<64x512xf32>
    tpu.vector_store %arg7[%c0_5, %c0_6], %5 {strides = array<i32>} : memref<64x512xf32, #tpu.memory_space<vmem>>, vector<64x512xf32>,
    %c0_7 = arith.constant 0 : index
    %c0_8 = arith.constant 0 : index
    %7 = vector.load %arg2[%c0_7, %c0_8] : memref<128x512xbf16, #tpu.memory_space<vmem>>, vector<128x512xbf16>
    %cst_9 = arith.constant 0.000000e+00 : f32
    %8 = vector.broadcast %cst_9 : f32 to vector<8x128xf32>
    %cst_10 = arith.constant 0.000000e+00 : f32
    %9 = vector.broadcast %cst_10 : f32 to vector<8x128xf32>
    %c0_i32 = arith.constant 0 : i32
    %c8_i32 = arith.constant 8 : i32
    %10 = arith.muli %c0_i32, %c8_i32 : i32
    %11 = tpu.assume_multiple %10, 8 : i32
    %12 = arith.index_cast %11 : i32 to index
    %c0_11 = arith.constant 0 : index
    %13 = vector.load %arg7[%12, %c0_11] : memref<64x512xf32, #tpu.memory_space<vmem>>, vector<8x512xf32>
    %14 = arith.truncf %8 : vector<8x128xf32> to vector<8x128xbf16>
    %cst_12 = arith.constant dense<0.000000e+00> : vector<8x512xf32>
    %15 = tpu.matmul %14, %7, %cst_12 {dimension_numbers = #tpu.dot_dimension_numbers<[1], [0], [0], [1], [0, 0, 1, 1], [], []>} : vector<8x128xbf16>, vector<128x512xbf16>, vector<8x512xf32> -> vector<8x512xf32>
    %16 = arith.addf %13, %15 : vector<8x512xf32>
    %17 = math.tanh %16 : vector<8x512xf32>
    %18 = vector.extract_strided_slice %17 {offsets = [0, 0], sizes = [8, 128], strides = [1, 1]} : vector<8x512xf32> to vector<8x128xf32>
    %cst_13 = arith.constant 5.000000e-01 : f32
    %19 = vector.broadcast %cst_13 : f32 to vector<8x128xf32>
    %20 = arith.mulf %19, %18 : vector<8x128xf32>
    %cst_14 = arith.constant 5.000000e-01 : f32
    %21 = vector.broadcast %cst_14 : f32 to vector<8x128xf32>
    %22 = arith.addf %20, %21 : vector<8x128xf32>
    %23 = vector.extract_strided_slice %17 {offsets = [0, 128], sizes = [8, 128], strides = [1, 1]} : vector<8x512xf32> to vector<8x128xf32>
    %cst_15 = arith.constant 5.000000e-01 : f32
    %24 = vector.broadcast %cst_15 : f32 to vector<8x128xf32>
    %25 = arith.mulf %24, %23 : vector<8x128xf32>
    %cst_16 = arith.constant 5.000000e-01 : f32
    %26 = vector.broadcast %cst_16 : f32 to vector<8x128xf32>
    %27 = arith.addf %25, %26 : vector<8x128xf32>
    %28 = vector.extract_strided_slice %17 {offsets = [0, 256], sizes = [8, 128], strides = [1, 1]} : vector<8x512xf32> to vector<8x128xf32>
    %cst_17 = arith.constant 5.000000e-01 : f32
    %29 = vector.broadcast %cst_17 : f32 to vector<8x128xf32>
    %30 = arith.mulf %29, %28 : vector<8x128xf32>
    %cst_18 = arith.constant 5.000000e-01 : f32
    %31 = vector.broadcast %cst_18 : f32 to vector<8x128xf32>
    %32 = arith.addf %30, %31 : vector<8x128xf32>
    %33 = vector.extract_strided_slice %17 {offsets = [0, 384], sizes = [8, 128], strides = [1, 1]} : vector<8x512xf32> to vector<8x128xf32>
    %34 = arith.mulf %27, %9 : vector<8x128xf32>
    %35 = arith.mulf %22, %33 : vector<8x128xf32>
    %36 = arith.addf %34, %35 : vector<8x128xf32>
    %37 = math.tanh %36 : vector<8x128xf32>
    %38 = arith.mulf %32, %37 : vector<8x128xf32>
    %c1_i32 = arith.constant 1 : i32
    %c8_i32_19 = arith.constant 8 : i32
    %39 = arith.muli %c1_i32, %c8_i32_19 : i32
    %40 = tpu.assume_multiple %39, 8 : i32
    %41 = arith.index_cast %40 : i32 to index
    %c0_20 = arith.constant 0 : index
    %42 = vector.load %arg7[%41, %c0_20] : memref<64x512xf32, #tpu.memory_space<vmem>>, vector<8x512xf32>
    %43 = arith.truncf %38 : vector<8x128xf32> to vector<8x128xbf16>
    %cst_21 = arith.constant dense<0.000000e+00> : vector<8x512xf32>
    %44 = tpu.matmul %43, %7, %cst_21 {dimension_numbers = #tpu.dot_dimension_numbers<[1], [0], [0], [1], [0, 0, 1, 1], [], []>} : vector<8x128xbf16>, vector<128x512xbf16>, vector<8x512xf32> -> vector<8x512xf32>
    %45 = arith.addf %42, %44 : vector<8x512xf32>
    %46 = math.tanh %45 : vector<8x512xf32>
    %47 = vector.extract_strided_slice %46 {offsets = [0, 0], sizes = [8, 128], strides = [1, 1]} : vector<8x512xf32> to vector<8x128xf32>
    %cst_22 = arith.constant 5.000000e-01 : f32
    %48 = vector.broadcast %cst_22 : f32 to vector<8x128xf32>
    %49 = arith.mulf %48, %47 : vector<8x128xf32>
    %cst_23 = arith.constant 5.000000e-01 : f32
    %50 = vector.broadcast %cst_23 : f32 to vector<8x128xf32>
    %51 = arith.addf %49, %50 : vector<8x128xf32>
    %52 = vector.extract_strided_slice %46 {offsets = [0, 128], sizes = [8, 128], strides = [1, 1]} : vector<8x512xf32> to vector<8x128xf32>
    %cst_24 = arith.constant 5.000000e-01 : f32
    %53 = vector.broadcast %cst_24 : f32 to vector<8x128xf32>
    %54 = arith.mulf %53, %52 : vector<8x128xf32>
    %cst_25 = arith.constant 5.000000e-01 : f32
    %55 = vector.broadcast %cst_25 : f32 to vector<8x128xf32>
    %56 = arith.addf %54, %55 : vector<8x128xf32>
    %57 = vector.extract_strided_slice %46 {offsets = [0, 256], sizes = [8, 128], strides = [1, 1]} : vector<8x512xf32> to vector<8x128xf32>
    %cst_26 = arith.constant 5.000000e-01 : f32
    %58 = vector.broadcast %cst_26 : f32 to vector<8x128xf32>
    %59 = arith.mulf %58, %57 : vector<8x128xf32>
    %cst_27 = arith.constant 5.000000e-01 : f32
    %60 = vector.broadcast %cst_27 : f32 to vector<8x128xf32>
    %61 = arith.addf %59, %60 : vector<8x128xf32>
    %62 = vector.extract_strided_slice %46 {offsets = [0, 384], sizes = [8, 128], strides = [1, 1]} : vector<8x512xf32> to vector<8x128xf32>
    %63 = arith.mulf %56, %36 : vector<8x128xf32>
    %64 = arith.mulf %51, %62 : vector<8x128xf32>
    %65 = arith.addf %63, %64 : vector<8x128xf32>
    %66 = math.tanh %65 : vector<8x128xf32>
    %67 = arith.mulf %61, %66 : vector<8x128xf32>
    %c2_i32 = arith.constant 2 : i32
    %c8_i32_28 = arith.constant 8 : i32
    %68 = arith.muli %c2_i32, %c8_i32_28 : i32
    %69 = tpu.assume_multiple %68, 8 : i32
    %70 = arith.index_cast %69 : i32 to index
    %c0_29 = arith.constant 0 : index
    %71 = vector.load %arg7[%70, %c0_29] : memref<64x512xf32, #tpu.memory_space<vmem>>, vector<8x512xf32>
    %72 = arith.truncf %67 : vector<8x128xf32> to vector<8x128xbf16>
    %cst_30 = arith.constant dense<0.000000e+00> : vector<8x512xf32>
    %73 = tpu.matmul %72, %7, %cst_30 {dimension_numbers = #tpu.dot_dimension_numbers<[1], [0], [0], [1], [0, 0, 1, 1], [], []>} : vector<8x128xbf16>, vector<128x512xbf16>, vector<8x512xf32> -> vector<8x512xf32>
    %74 = arith.addf %71, %73 : vector<8x512xf32>
    %75 = math.tanh %74 : vector<8x512xf32>
    %76 = vector.extract_strided_slice %75 {offsets = [0, 0], sizes = [8, 128], strides = [1, 1]} : vector<8x512xf32> to vector<8x128xf32>
    %cst_31 = arith.constant 5.000000e-01 : f32
    %77 = vector.broadcast %cst_31 : f32 to vector<8x128xf32>
    %78 = arith.mulf %77, %76 : vector<8x128xf32>
    %cst_32 = arith.constant 5.000000e-01 : f32
    %79 = vector.broadcast %cst_32 : f32 to vector<8x128xf32>
    %80 = arith.addf %78, %79 : vector<8x128xf32>
    %81 = vector.extract_strided_slice %75 {offsets = [0, 128], sizes = [8, 128], strides = [1, 1]} : vector<8x512xf32> to vector<8x128xf32>
    %cst_33 = arith.constant 5.000000e-01 : f32
    %82 = vector.broadcast %cst_33 : f32 to vector<8x128xf32>
    %83 = arith.mulf %82, %81 : vector<8x128xf32>
    %cst_34 = arith.constant 5.000000e-01 : f32
    %84 = vector.broadcast %cst_34 : f32 to vector<8x128xf32>
    %85 = arith.addf %83, %84 : vector<8x128xf32>
    %86 = vector.extract_strided_slice %75 {offsets = [0, 256], sizes = [8, 128], strides = [1, 1]} : vector<8x512xf32> to vector<8x128xf32>
    %cst_35 = arith.constant 5.000000e-01 : f32
    %87 = vector.broadcast %cst_35 : f32 to vector<8x128xf32>
    %88 = arith.mulf %87, %86 : vector<8x128xf32>
    %cst_36 = arith.constant 5.000000e-01 : f32
    %89 = vector.broadcast %cst_36 : f32 to vector<8x128xf32>
    %90 = arith.addf %88, %89 : vector<8x128xf32>
    %91 = vector.extract_strided_slice %75 {offsets = [0, 384], sizes = [8, 128], strides = [1, 1]} : vector<8x512xf32> to vector<8x128xf32>
    %92 = arith.mulf %85, %65 : vector<8x128xf32>
    %93 = arith.mulf %80, %91 : vector<8x128xf32>
    %94 = arith.addf %92, %93 : vector<8x128xf32>
    %95 = math.tanh %94 : vector<8x128xf32>
    %96 = arith.mulf %90, %95 : vector<8x128xf32>
    %c3_i32 = arith.constant 3 : i32
    %c8_i32_37 = arith.constant 8 : i32
    %97 = arith.muli %c3_i32, %c8_i32_37 : i32
    %98 = tpu.assume_multiple %97, 8 : i32
    %99 = arith.index_cast %98 : i32 to index
    %c0_38 = arith.constant 0 : index
    %100 = vector.load %arg7[%99, %c0_38] : memref<64x512xf32, #tpu.memory_space<vmem>>, vector<8x512xf32>
    %101 = arith.truncf %96 : vector<8x128xf32> to vector<8x128xbf16>
    %cst_39 = arith.constant dense<0.000000e+00> : vector<8x512xf32>
    %102 = tpu.matmul %101, %7, %cst_39 {dimension_numbers = #tpu.dot_dimension_numbers<[1], [0], [0], [1], [0, 0, 1, 1], [], []>} : vector<8x128xbf16>, vector<128x512xbf16>, vector<8x512xf32> -> vector<8x512xf32>
    %103 = arith.addf %100, %102 : vector<8x512xf32>
    %104 = math.tanh %103 : vector<8x512xf32>
    %105 = vector.extract_strided_slice %104 {offsets = [0, 0], sizes = [8, 128], strides = [1, 1]} : vector<8x512xf32> to vector<8x128xf32>
    %cst_40 = arith.constant 5.000000e-01 : f32
    %106 = vector.broadcast %cst_40 : f32 to vector<8x128xf32>
    %107 = arith.mulf %106, %105 : vector<8x128xf32>
    %cst_41 = arith.constant 5.000000e-01 : f32
    %108 = vector.broadcast %cst_41 : f32 to vector<8x128xf32>
    %109 = arith.addf %107, %108 : vector<8x128xf32>
    %110 = vector.extract_strided_slice %104 {offsets = [0, 128], sizes = [8, 128], strides = [1, 1]} : vector<8x512xf32> to vector<8x128xf32>
    %cst_42 = arith.constant 5.000000e-01 : f32
    %111 = vector.broadcast %cst_42 : f32 to vector<8x128xf32>
    %112 = arith.mulf %111, %110 : vector<8x128xf32>
    %cst_43 = arith.constant 5.000000e-01 : f32
    %113 = vector.broadcast %cst_43 : f32 to vector<8x128xf32>
    %114 = arith.addf %112, %113 : vector<8x128xf32>
    %115 = vector.extract_strided_slice %104 {offsets = [0, 256], sizes = [8, 128], strides = [1, 1]} : vector<8x512xf32> to vector<8x128xf32>
    %cst_44 = arith.constant 5.000000e-01 : f32
    %116 = vector.broadcast %cst_44 : f32 to vector<8x128xf32>
    %117 = arith.mulf %116, %115 : vector<8x128xf32>
    %cst_45 = arith.constant 5.000000e-01 : f32
    %118 = vector.broadcast %cst_45 : f32 to vector<8x128xf32>
    %119 = arith.addf %117, %118 : vector<8x128xf32>
    %120 = vector.extract_strided_slice %104 {offsets = [0, 384], sizes = [8, 128], strides = [1, 1]} : vector<8x512xf32> to vector<8x128xf32>
    %121 = arith.mulf %114, %94 : vector<8x128xf32>
    %122 = arith.mulf %109, %120 : vector<8x128xf32>
    %123 = arith.addf %121, %122 : vector<8x128xf32>
    %124 = math.tanh %123 : vector<8x128xf32>
    %125 = arith.mulf %119, %124 : vector<8x128xf32>
    %c4_i32 = arith.constant 4 : i32
    %c8_i32_46 = arith.constant 8 : i32
    %126 = arith.muli %c4_i32, %c8_i32_46 : i32
    %127 = tpu.assume_multiple %126, 8 : i32
    %128 = arith.index_cast %127 : i32 to index
    %c0_47 = arith.constant 0 : index
    %129 = vector.load %arg7[%128, %c0_47] : memref<64x512xf32, #tpu.memory_space<vmem>>, vector<8x512xf32>
    %130 = arith.truncf %125 : vector<8x128xf32> to vector<8x128xbf16>
    %cst_48 = arith.constant dense<0.000000e+00> : vector<8x512xf32>
    %131 = tpu.matmul %130, %7, %cst_48 {dimension_numbers = #tpu.dot_dimension_numbers<[1], [0], [0], [1], [0, 0, 1, 1], [], []>} : vector<8x128xbf16>, vector<128x512xbf16>, vector<8x512xf32> -> vector<8x512xf32>
    %132 = arith.addf %129, %131 : vector<8x512xf32>
    %133 = math.tanh %132 : vector<8x512xf32>
    %134 = vector.extract_strided_slice %133 {offsets = [0, 0], sizes = [8, 128], strides = [1, 1]} : vector<8x512xf32> to vector<8x128xf32>
    %cst_49 = arith.constant 5.000000e-01 : f32
    %135 = vector.broadcast %cst_49 : f32 to vector<8x128xf32>
    %136 = arith.mulf %135, %134 : vector<8x128xf32>
    %cst_50 = arith.constant 5.000000e-01 : f32
    %137 = vector.broadcast %cst_50 : f32 to vector<8x128xf32>
    %138 = arith.addf %136, %137 : vector<8x128xf32>
    %139 = vector.extract_strided_slice %133 {offsets = [0, 128], sizes = [8, 128], strides = [1, 1]} : vector<8x512xf32> to vector<8x128xf32>
    %cst_51 = arith.constant 5.000000e-01 : f32
    %140 = vector.broadcast %cst_51 : f32 to vector<8x128xf32>
    %141 = arith.mulf %140, %139 : vector<8x128xf32>
    %cst_52 = arith.constant 5.000000e-01 : f32
    %142 = vector.broadcast %cst_52 : f32 to vector<8x128xf32>
    %143 = arith.addf %141, %142 : vector<8x128xf32>
    %144 = vector.extract_strided_slice %133 {offsets = [0, 256], sizes = [8, 128], strides = [1, 1]} : vector<8x512xf32> to vector<8x128xf32>
    %cst_53 = arith.constant 5.000000e-01 : f32
    %145 = vector.broadcast %cst_53 : f32 to vector<8x128xf32>
    %146 = arith.mulf %145, %144 : vector<8x128xf32>
    %cst_54 = arith.constant 5.000000e-01 : f32
    %147 = vector.broadcast %cst_54 : f32 to vector<8x128xf32>
    %148 = arith.addf %146, %147 : vector<8x128xf32>
    %149 = vector.extract_strided_slice %133 {offsets = [0, 384], sizes = [8, 128], strides = [1, 1]} : vector<8x512xf32> to vector<8x128xf32>
    %150 = arith.mulf %143, %123 : vector<8x128xf32>
    %151 = arith.mulf %138, %149 : vector<8x128xf32>
    %152 = arith.addf %150, %151 : vector<8x128xf32>
    %153 = math.tanh %152 : vector<8x128xf32>
    %154 = arith.mulf %148, %153 : vector<8x128xf32>
    %c5_i32 = arith.constant 5 : i32
    %c8_i32_55 = arith.constant 8 : i32
    %155 = arith.muli %c5_i32, %c8_i32_55 : i32
    %156 = tpu.assume_multiple %155, 8 : i32
    %157 = arith.index_cast %156 : i32 to index
    %c0_56 = arith.constant 0 : index
    %158 = vector.load %arg7[%157, %c0_56] : memref<64x512xf32, #tpu.memory_space<vmem>>, vector<8x512xf32>
    %159 = arith.truncf %154 : vector<8x128xf32> to vector<8x128xbf16>
    %cst_57 = arith.constant dense<0.000000e+00> : vector<8x512xf32>
    %160 = tpu.matmul %159, %7, %cst_57 {dimension_numbers = #tpu.dot_dimension_numbers<[1], [0], [0], [1], [0, 0, 1, 1], [], []>} : vector<8x128xbf16>, vector<128x512xbf16>, vector<8x512xf32> -> vector<8x512xf32>
    %161 = arith.addf %158, %160 : vector<8x512xf32>
    %162 = math.tanh %161 : vector<8x512xf32>
    %163 = vector.extract_strided_slice %162 {offsets = [0, 0], sizes = [8, 128], strides = [1, 1]} : vector<8x512xf32> to vector<8x128xf32>
    %cst_58 = arith.constant 5.000000e-01 : f32
    %164 = vector.broadcast %cst_58 : f32 to vector<8x128xf32>
    %165 = arith.mulf %164, %163 : vector<8x128xf32>
    %cst_59 = arith.constant 5.000000e-01 : f32
    %166 = vector.broadcast %cst_59 : f32 to vector<8x128xf32>
    %167 = arith.addf %165, %166 : vector<8x128xf32>
    %168 = vector.extract_strided_slice %162 {offsets = [0, 128], sizes = [8, 128], strides = [1, 1]} : vector<8x512xf32> to vector<8x128xf32>
    %cst_60 = arith.constant 5.000000e-01 : f32
    %169 = vector.broadcast %cst_60 : f32 to vector<8x128xf32>
    %170 = arith.mulf %169, %168 : vector<8x128xf32>
    %cst_61 = arith.constant 5.000000e-01 : f32
    %171 = vector.broadcast %cst_61 : f32 to vector<8x128xf32>
    %172 = arith.addf %170, %171 : vector<8x128xf32>
    %173 = vector.extract_strided_slice %162 {offsets = [0, 256], sizes = [8, 128], strides = [1, 1]} : vector<8x512xf32> to vector<8x128xf32>
    %cst_62 = arith.constant 5.000000e-01 : f32
    %174 = vector.broadcast %cst_62 : f32 to vector<8x128xf32>
    %175 = arith.mulf %174, %173 : vector<8x128xf32>
    %cst_63 = arith.constant 5.000000e-01 : f32
    %176 = vector.broadcast %cst_63 : f32 to vector<8x128xf32>
    %177 = arith.addf %175, %176 : vector<8x128xf32>
    %178 = vector.extract_strided_slice %162 {offsets = [0, 384], sizes = [8, 128], strides = [1, 1]} : vector<8x512xf32> to vector<8x128xf32>
    %179 = arith.mulf %172, %152 : vector<8x128xf32>
    %180 = arith.mulf %167, %178 : vector<8x128xf32>
    %181 = arith.addf %179, %180 : vector<8x128xf32>
    %182 = math.tanh %181 : vector<8x128xf32>
    %183 = arith.mulf %177, %182 : vector<8x128xf32>
    %c6_i32 = arith.constant 6 : i32
    %c8_i32_64 = arith.constant 8 : i32
    %184 = arith.muli %c6_i32, %c8_i32_64 : i32
    %185 = tpu.assume_multiple %184, 8 : i32
    %186 = arith.index_cast %185 : i32 to index
    %c0_65 = arith.constant 0 : index
    %187 = vector.load %arg7[%186, %c0_65] : memref<64x512xf32, #tpu.memory_space<vmem>>, vector<8x512xf32>
    %188 = arith.truncf %183 : vector<8x128xf32> to vector<8x128xbf16>
    %cst_66 = arith.constant dense<0.000000e+00> : vector<8x512xf32>
    %189 = tpu.matmul %188, %7, %cst_66 {dimension_numbers = #tpu.dot_dimension_numbers<[1], [0], [0], [1], [0, 0, 1, 1], [], []>} : vector<8x128xbf16>, vector<128x512xbf16>, vector<8x512xf32> -> vector<8x512xf32>
    %190 = arith.addf %187, %189 : vector<8x512xf32>
    %191 = math.tanh %190 : vector<8x512xf32>
    %192 = vector.extract_strided_slice %191 {offsets = [0, 0], sizes = [8, 128], strides = [1, 1]} : vector<8x512xf32> to vector<8x128xf32>
    %cst_67 = arith.constant 5.000000e-01 : f32
    %193 = vector.broadcast %cst_67 : f32 to vector<8x128xf32>
    %194 = arith.mulf %193, %192 : vector<8x128xf32>
    %cst_68 = arith.constant 5.000000e-01 : f32
    %195 = vector.broadcast %cst_68 : f32 to vector<8x128xf32>
    %196 = arith.addf %194, %195 : vector<8x128xf32>
    %197 = vector.extract_strided_slice %191 {offsets = [0, 128], sizes = [8, 128], strides = [1, 1]} : vector<8x512xf32> to vector<8x128xf32>
    %cst_69 = arith.constant 5.000000e-01 : f32
    %198 = vector.broadcast %cst_69 : f32 to vector<8x128xf32>
    %199 = arith.mulf %198, %197 : vector<8x128xf32>
    %cst_70 = arith.constant 5.000000e-01 : f32
    %200 = vector.broadcast %cst_70 : f32 to vector<8x128xf32>
    %201 = arith.addf %199, %200 : vector<8x128xf32>
    %202 = vector.extract_strided_slice %191 {offsets = [0, 256], sizes = [8, 128], strides = [1, 1]} : vector<8x512xf32> to vector<8x128xf32>
    %cst_71 = arith.constant 5.000000e-01 : f32
    %203 = vector.broadcast %cst_71 : f32 to vector<8x128xf32>
    %204 = arith.mulf %203, %202 : vector<8x128xf32>
    %cst_72 = arith.constant 5.000000e-01 : f32
    %205 = vector.broadcast %cst_72 : f32 to vector<8x128xf32>
    %206 = arith.addf %204, %205 : vector<8x128xf32>
    %207 = vector.extract_strided_slice %191 {offsets = [0, 384], sizes = [8, 128], strides = [1, 1]} : vector<8x512xf32> to vector<8x128xf32>
    %208 = arith.mulf %201, %181 : vector<8x128xf32>
    %209 = arith.mulf %196, %207 : vector<8x128xf32>
    %210 = arith.addf %208, %209 : vector<8x128xf32>
    %211 = math.tanh %210 : vector<8x128xf32>
    %212 = arith.mulf %206, %211 : vector<8x128xf32>
    %c7_i32 = arith.constant 7 : i32
    %c8_i32_73 = arith.constant 8 : i32
    %213 = arith.muli %c7_i32, %c8_i32_73 : i32
    %214 = tpu.assume_multiple %213, 8 : i32
    %215 = arith.index_cast %214 : i32 to index
    %c0_74 = arith.constant 0 : index
    %216 = vector.load %arg7[%215, %c0_74] : memref<64x512xf32, #tpu.memory_space<vmem>>, vector<8x512xf32>
    %217 = arith.truncf %212 : vector<8x128xf32> to vector<8x128xbf16>
    %cst_75 = arith.constant dense<0.000000e+00> : vector<8x512xf32>
    %218 = tpu.matmul %217, %7, %cst_75 {dimension_numbers = #tpu.dot_dimension_numbers<[1], [0], [0], [1], [0, 0, 1, 1], [], []>} : vector<8x128xbf16>, vector<128x512xbf16>, vector<8x512xf32> -> vector<8x512xf32>
    %219 = arith.addf %216, %218 : vector<8x512xf32>
    %220 = math.tanh %219 : vector<8x512xf32>
    %221 = vector.extract_strided_slice %220 {offsets = [0, 0], sizes = [8, 128], strides = [1, 1]} : vector<8x512xf32> to vector<8x128xf32>
    %cst_76 = arith.constant 5.000000e-01 : f32
    %222 = vector.broadcast %cst_76 : f32 to vector<8x128xf32>
    %223 = arith.mulf %222, %221 : vector<8x128xf32>
    %cst_77 = arith.constant 5.000000e-01 : f32
    %224 = vector.broadcast %cst_77 : f32 to vector<8x128xf32>
    %225 = arith.addf %223, %224 : vector<8x128xf32>
    %226 = vector.extract_strided_slice %220 {offsets = [0, 128], sizes = [8, 128], strides = [1, 1]} : vector<8x512xf32> to vector<8x128xf32>
    %cst_78 = arith.constant 5.000000e-01 : f32
    %227 = vector.broadcast %cst_78 : f32 to vector<8x128xf32>
    %228 = arith.mulf %227, %226 : vector<8x128xf32>
    %cst_79 = arith.constant 5.000000e-01 : f32
    %229 = vector.broadcast %cst_79 : f32 to vector<8x128xf32>
    %230 = arith.addf %228, %229 : vector<8x128xf32>
    %231 = vector.extract_strided_slice %220 {offsets = [0, 256], sizes = [8, 128], strides = [1, 1]} : vector<8x512xf32> to vector<8x128xf32>
    %cst_80 = arith.constant 5.000000e-01 : f32
    %232 = vector.broadcast %cst_80 : f32 to vector<8x128xf32>
    %233 = arith.mulf %232, %231 : vector<8x128xf32>
    %cst_81 = arith.constant 5.000000e-01 : f32
    %234 = vector.broadcast %cst_81 : f32 to vector<8x128xf32>
    %235 = arith.addf %233, %234 : vector<8x128xf32>
    %236 = vector.extract_strided_slice %220 {offsets = [0, 384], sizes = [8, 128], strides = [1, 1]} : vector<8x512xf32> to vector<8x128xf32>
    %237 = arith.mulf %230, %210 : vector<8x128xf32>
    %238 = arith.mulf %225, %236 : vector<8x128xf32>
    %239 = arith.addf %237, %238 : vector<8x128xf32>
    %240 = math.tanh %239 : vector<8x128xf32>
    %241 = arith.mulf %235, %240 : vector<8x128xf32>
    %c8_i32_82 = arith.constant 8 : i32
    %242 = arith.truncf %241 : vector<8x128xf32> to vector<8x128xbf16>
    %c0_83 = arith.constant 0 : index
    %c0_84 = arith.constant 0 : index
    %243 = vector.load %arg4[%c0_83, %c0_84] : memref<128x128xbf16, #tpu.memory_space<vmem>>, vector<128x128xbf16>
    %cst_85 = arith.constant dense<0.000000e+00> : vector<8x128xf32>
    %244 = tpu.matmul %242, %243, %cst_85 {dimension_numbers = #tpu.dot_dimension_numbers<[1], [0], [0], [1], [0, 0, 1, 1], [], []>} : vector<8x128xbf16>, vector<128x128xbf16>, vector<8x128xf32> -> vector<8x128xf32>
    %c0_86 = arith.constant 0 : index
    %c0_87 = arith.constant 0 : index
    %245 = vector.load %arg5[%c0_86, %c0_87] : memref<1x128xf32, #tpu.memory_space<vmem>>, vector<1x128xf32>
    %246 = vector.broadcast %245 : vector<1x128xf32> to vector<8x128xf32>
    %247 = arith.addf %244, %246 : vector<8x128xf32>
    %c0_88 = arith.constant 0 : index
    %c0_89 = arith.constant 0 : index
    %248 = vector.load %arg6[%c0_88, %c0_89] : memref<8x128xf32, #tpu.memory_space<vmem>>, vector<8x128xf32>
    tpu.vector_store %arg6[%c0_88, %c0_89], %247 {strides = array<i32>} : memref<8x128xf32, #tpu.memory_space<vmem>>, vector<8x128xf32>,
    return
  }
}

</mosaic_0001>

<llo_original>
// kernel: tpu_custom_call.1
$region0: #{tpu_custom_call.1}
  #allocation0 [shape = 'u32[]', space=smem, size = 0x4, offset = 0x4, fixed_abs, tag = 'smem constant byte address 0x4 - core index']
  #allocation1 [shape = 'u32[144,128]{1,0:T(1,128)}', space=vmem, size = 0x12000, scoped, tag = 'internal scratch']
  #allocation2 [shape = 'f32[64,512]{1,0:T(8,128)}', space=vmem, size = 0x20000, scoped, tag = 'scratch operand']
  %s0 = inlined_call_operand.hbm [shape: bf16[64,128], index: 0, kind: input, shape index: {}]
  %s1 = inlined_call_operand.hbm [shape: bf16[128,512], index: 1, kind: input, shape index: {}]
  %s2 = inlined_call_operand.hbm [shape: bf16[128,512], index: 2, kind: input, shape index: {}]
  %s3 = inlined_call_operand.vmem [shape: f32[1,512], index: 3, kind: input, shape index: {}]
  %s4 = inlined_call_operand.hbm [shape: bf16[128,128], index: 4, kind: input, shape index: {}]
  %s5 = inlined_call_operand.vmem [shape: f32[1,128], index: 5, kind: input, shape index: {}]
  %s6 = inlined_call_operand.hbm [shape: f32[8,128], index: 6, kind: output, shape index: {}]
  %s7 = sld [smem:[#allocation0]]
  $region50: #{tpu_custom_call.1} parent=0
    _
  %s9 = ssub.s32 1, %s7
  %s10 = scalar_select 0, %s9, %s7
  $region1: #{tpu_custom_call.1} parent=0
    #allocation3 [shape = 'u8[16384]{0}', space=vmem, size = 0x4000, scoped, tag = 'input window, operand 0, single buffered']
    #allocation4 [shape = 's32[1]{0}', space=sflag, size = 0x4, scoped, tag = 'scoped memory for tpu_custom_call.1']
    #allocation5 [shape = 's32[1]{0}', space=sflag, size = 0x4, scoped, tag = 'scoped memory for tpu_custom_call.1']
    #allocation6 [shape = 'u8[131072]{0}', space=vmem, size = 0x20000, scoped, tag = 'input window, operand 1, single buffered']
    #allocation7 [shape = 's32[1]{0}', space=sflag, size = 0x4, scoped, tag = 'scoped memory for tpu_custom_call.1']
    #allocation8 [shape = 'u8[131072]{0}', space=vmem, size = 0x20000, scoped, tag = 'input window, operand 2, single buffered']
    #allocation9 [shape = 'u8[32768]{0}', space=vmem, size = 0x8000, scoped, tag = 'input window, operand 4, single buffered']
    #allocation10 [shape = 's32[1]{0}', space=sflag, size = 0x4, scoped, tag = 'scoped memory for tpu_custom_call.1']
    #allocation11 [shape = 'u8[4096]{0}', space=vmem, size = 0x1000, scoped, tag = 'output window, operand 0, single buffered']
    %11 = vsyncpa [#allocation4], 0
    %12 = vsyncpa [#allocation7], 0
    %13 = vsyncpa [#allocation10], 0
    %14 = vsyncpa [#allocation5], 0
    // Predicated region
    $region2: #{tpu_custom_call.1} parent=1 // pred_check
      _
    $region3: #{tpu_custom_call.1} parent=1 // pred_check_branch
      %16 = sbr.rel (0) target = $region5
    $region4: #{tpu_custom_call.1} parent=1 // pred_region
      %s18 = ssub.s32 512, 512
      %19 = vsyncadd [#allocation4], %s18
      %s20 = sshll.u32 [#allocation3], 4
      %s21 = int_to_ptr.vmem [resolvable:$true] %s20
      %26 = dma.hbm_to_vmem [thread:$0]  %s0, 512, %s21, [#allocation4], 64, 64, 4
    $region5: #{tpu_custom_call.1} parent=1 // pred_fallthru
      _
    // Predicated region
    $region6: #{tpu_custom_call.1} parent=1 // pred_check
      _
    $region7: #{tpu_custom_call.1} parent=1 // pred_check_branch
      %28 = sbr.rel (0) target = $region9
    $region8: #{tpu_custom_call.1} parent=1 // pred_region
      %s30 = ssub.s32 4096, 4096
      %31 = vsyncadd [#allocation7], %s30
      %s32 = sshll.u32 [#allocation6], 4
      %s33 = int_to_ptr.vmem [resolvable:$true] %s32
      %38 = dma.hbm_to_vmem [thread:$0]  %s1, 4096, %s33, [#allocation7], 256, 256, 16
    $region9: #{tpu_custom_call.1} parent=1 // pred_fallthru
      _
    // Predicated region
    $region10: #{tpu_custom_call.1} parent=1 // pred_check
      _
    $region11: #{tpu_custom_call.1} parent=1 // pred_check_branch
      %40 = sbr.rel (0) target = $region13
    $region12: #{tpu_custom_call.1} parent=1 // pred_region
      %s42 = ssub.s32 4096, 4096
      %43 = vsyncadd [#allocation7], %s42
      %s44 = sshll.u32 [#allocation8], 4
      %s45 = int_to_ptr.vmem [resolvable:$true] %s44
      %50 = dma.hbm_to_vmem [thread:$0]  %s2, 4096, %s45, [#allocation7], 256, 256, 16
    $region13: #{tpu_custom_call.1} parent=1 // pred_fallthru
      _
    // Predicated region
    $region14: #{tpu_custom_call.1} parent=1 // pred_check
      _
    $region15: #{tpu_custom_call.1} parent=1 // pred_check_branch
      %52 = sbr.rel (0) target = $region17
    $region16: #{tpu_custom_call.1} parent=1 // pred_region
      _
    $region17: #{tpu_custom_call.1} parent=1 // pred_fallthru
      _
    // Predicated region
    $region18: #{tpu_custom_call.1} parent=1 // pred_check
      _
    $region19: #{tpu_custom_call.1} parent=1 // pred_check_branch
      %54 = sbr.rel (0) target = $region21
    $region20: #{tpu_custom_call.1} parent=1 // pred_region
      %s56 = ssub.s32 1024, 1024
      %57 = vsyncadd [#allocation10], %s56
      %s58 = sshll.u32 [#allocation9], 4
      %s59 = int_to_ptr.vmem [resolvable:$true] %s58
      %64 = dma.hbm_to_vmem [thread:$0]  %s4, 1024, %s59, [#allocation10], 64, 64, 4
    $region21: #{tpu_custom_call.1} parent=1 // pred_fallthru
      _
    // Predicated region
    $region22: #{tpu_custom_call.1} parent=1 // pred_check
      _
    $region23: #{tpu_custom_call.1} parent=1 // pred_check_branch
      %66 = sbr.rel (0) target = $region25
    $region24: #{tpu_custom_call.1} parent=1 // pred_region
      _
    $region25: #{tpu_custom_call.1} parent=1 // pred_fallthru
      _
    // Predicated region
    $region26: #{tpu_custom_call.1} parent=1 // pred_check
      _
    $region27: #{tpu_custom_call.1} parent=1 // pred_check_branch
      %68 = sbr.rel (0) target = $region29
    $region28: #{tpu_custom_call.1} parent=1 // pred_region
      %69 = dma.done [#allocation4], 512
    $region29: #{tpu_custom_call.1} parent=1 // pred_fallthru
      _
    // Predicated region
    $region30: #{tpu_custom_call.1} parent=1 // pred_check
      _
    $region31: #{tpu_custom_call.1} parent=1 // pred_check_branch
      %71 = sbr.rel (0) target = $region33
    $region32: #{tpu_custom_call.1} parent=1 // pred_region
      %72 = dma.done [#allocation7], 4096
    $region33: #{tpu_custom_call.1} parent=1 // pred_fallthru
      _
    // Predicated region
    $region34: #{tpu_custom_call.1} parent=1 // pred_check
      _
    $region35: #{tpu_custom_call.1} parent=1 // pred_check_branch
      %74 = sbr.rel (0) target = $region37
    $region36: #{tpu_custom_call.1} parent=1 // pred_region
      %75 = dma.done [#allocation7], 4096
    $region37: #{tpu_custom_call.1} parent=1 // pred_fallthru
      _
    // Predicated region
    $region38: #{tpu_custom_call.1} parent=1 // pred_check
      _
    $region39: #{tpu_custom_call.1} parent=1 // pred_check_branch
      %77 = sbr.rel (0) target = $region41
    $region40: #{tpu_custom_call.1} parent=1 // pred_region
      %78 = dma.done [#allocation10], 1024
    $region41: #{tpu_custom_call.1} parent=1 // pred_fallthru
      _
    %v80 = vld [vmem:[#allocation3] sm:$0xf]
    %v81 = vld [vmem:[#allocation3 + $0x4] sm:$0xf]
    %v82 = vld [vmem:[#allocation3 + $0x8] sm:$0xf]
    %v83 = vld [vmem:[#allocation3 + $0xc] sm:$0xf]
    %v84 = vld [vmem:[#allocation3 + $0x10] sm:$0xf]
    %v85 = vld [vmem:[#allocation3 + $0x14] sm:$0xf]
    %v86 = vld [vmem:[#allocation3 + $0x18] sm:$0xf]
    %v87 = vld [vmem:[#allocation3 + $0x1c] sm:$0xf]
    %v88 = vld [vmem:[#allocation6] sm:$0xff]
    %v89 = vld [vmem:[#allocation6 + $0x8] sm:$0xff]
    %v90 = vld [vmem:[#allocation6 + $0x10] sm:$0xff]
    %v91 = vld [vmem:[#allocation6 + $0x18] sm:$0xff]
    %v92 = vld [vmem:[#allocation6 + $0x20] sm:$0xff]
    %v93 = vld [vmem:[#allocation6 + $0x28] sm:$0xff]
    %v94 = vld [vmem:[#allocation6 + $0x30] sm:$0xff]
    %v95 = vld [vmem:[#allocation6 + $0x38] sm:$0xff]
    %v96 = vld [vmem:[#allocation6 + $0x40] sm:$0xff]
    %v97 = vld [vmem:[#allocation6 + $0x48] sm:$0xff]
    %v98 = vld [vmem:[#allocation6 + $0x50] sm:$0xff]
    %v99 = vld [vmem:[#allocation6 + $0x58] sm:$0xff]
    %v100 = vld [vmem:[#allocation6 + $0x60] sm:$0xff]
    %v101 = vld [vmem:[#allocation6 + $0x68] sm:$0xff]
    %v102 = vld [vmem:[#allocation6 + $0x70] sm:$0xff]
    %v103 = vld [vmem:[#allocation6 + $0x78] sm:$0xff]
    %v104 = vld [vmem:[#allocation6 + $0x80] sm:$0xff]
    %v105 = vld [vmem:[#allocation6 + $0x88] sm:$0xff]
    %v106 = vld [vmem:[#allocation6 + $0x90] sm:$0xff]
    %v107 = vld [vmem:[#allocation6 + $0x98] sm:$0xff]
    %v108 = vld [vmem:[#allocation6 + $0xa0] sm:$0xff]
    %v109 = vld [vmem:[#allocation6 + $0xa8] sm:$0xff]
    %v110 = vld [vmem:[#allocation6 + $0xb0] sm:$0xff]
    %v111 = vld [vmem:[#allocation6 + $0xb8] sm:$0xff]
    %v112 = vld [vmem:[#allocation6 + $0xc0] sm:$0xff]
    %v113 = vld [vmem:[#allocation6 + $0xc8] sm:$0xff]
    %v114 = vld [vmem:[#allocation6 + $0xd0] sm:$0xff]
    %v115 = vld [vmem:[#allocation6 + $0xd8] sm:$0xff]
    %v116 = vld [vmem:[#allocation6 + $0xe0] sm:$0xff]
    %v117 = vld [vmem:[#allocation6 + $0xe8] sm:$0xff]
    %v118 = vld [vmem:[#allocation6 + $0xf0] sm:$0xff]
    %v119 = vld [vmem:[#allocation6 + $0xf8] sm:$0xff]
    %v120 = vld [vmem:[%s3] sm:$0xf]
    %v122 = vlaneseq
    %v123 = vshrl.u32 %v122, 7
    %v124 = vsub.s32 0, %v123
    %v125 = vrot.slane %v120, %v124
    %v126 = vlaneseq
    %v127 = vshrl.u32 %v126, 7
    %v128 = vsub.s32 1, %v127
    %v129 = vrot.slane %v120, %v128
    %v130 = vlaneseq
    %v131 = vshrl.u32 %v130, 7
    %v132 = vsub.s32 2, %v131
    %v133 = vrot.slane %v120, %v132
    %v134 = vlaneseq
    %v135 = vshrl.u32 %v134, 7
    %v136 = vsub.s32 3, %v135
    %v137 = vrot.slane %v120, %v136
    %v150 = vunpack.c.l.b16 %v80
    %v151 = vunpack.c.l.b16 %v81
    %v152 = vunpack.c.l.b16 %v82
    %v153 = vunpack.c.l.b16 %v83
    %v154 = vunpack.c.l.b16 %v84
    %v155 = vunpack.c.l.b16 %v85
    %v156 = vunpack.c.l.b16 %v86
    %v157 = vunpack.c.l.b16 %v87
    %v158 = vpack.c.b16 %v151, %v150
    %v159 = vpack.c.b16 %v153, %v152
    %v160 = vpack.c.b16 %v155, %v154
    %v161 = vpack.c.b16 %v157, %v156
    %v198 = vunpack.c.l.b16 %v88
    %v199 = vunpack.c.h.b16 %v88
    %v200 = vunpack.c.l.b16 %v89
    %v201 = vunpack.c.h.b16 %v89
    %v202 = vunpack.c.l.b16 %v90
    %v203 = vunpack.c.h.b16 %v90
    %v204 = vunpack.c.l.b16 %v91
    %v205 = vunpack.c.h.b16 %v91
    %v206 = vunpack.c.l.b16 %v92
    %v207 = vunpack.c.h.b16 %v92
    %v208 = vunpack.c.l.b16 %v93
    %v209 = vunpack.c.h.b16 %v93
    %v210 = vunpack.c.l.b16 %v94
    %v211 = vunpack.c.h.b16 %v94
    %v212 = vunpack.c.l.b16 %v95
    %v213 = vunpack.c.h.b16 %v95
    %v214 = vunpack.c.l.b16 %v96
    %v215 = vunpack.c.h.b16 %v96
    %v216 = vunpack.c.l.b16 %v97
    %v217 = vunpack.c.h.b16 %v97
    %v218 = vunpack.c.l.b16 %v98
    %v219 = vunpack.c.h.b16 %v98
    %v220 = vunpack.c.l.b16 %v99
    %v221 = vunpack.c.h.b16 %v99
    %v222 = vunpack.c.l.b16 %v100
    %v223 = vunpack.c.h.b16 %v100
    %v224 = vunpack.c.l.b16 %v101
    %v225 = vunpack.c.h.b16 %v101
    %v226 = vunpack.c.l.b16 %v102
    %v227 = vunpack.c.h.b16 %v102
    %v228 = vunpack.c.l.b16 %v103
    %v229 = vunpack.c.h.b16 %v103
    %v230 = vunpack.c.l.b16 %v104
    %v231 = vunpack.c.h.b16 %v104
    %v232 = vunpack.c.l.b16 %v105
    %v233 = vunpack.c.h.b16 %v105
    %v234 = vunpack.c.l.b16 %v106
    %v235 = vunpack.c.h.b16 %v106
    %v236 = vunpack.c.l.b16 %v107
    %v237 = vunpack.c.h.b16 %v107
    %v238 = vunpack.c.l.b16 %v108
    %v239 = vunpack.c.h.b16 %v108
    %v240 = vunpack.c.l.b16 %v109
    %v241 = vunpack.c.h.b16 %v109
    %v242 = vunpack.c.l.b16 %v110
    %v243 = vunpack.c.h.b16 %v110
    %v244 = vunpack.c.l.b16 %v111
    %v245 = vunpack.c.h.b16 %v111
    %v246 = vunpack.c.l.b16 %v112
    %v247 = vunpack.c.h.b16 %v112
    %v248 = vunpack.c.l.b16 %v113
    %v249 = vunpack.c.h.b16 %v113
    %v250 = vunpack.c.l.b16 %v114
    %v251 = vunpack.c.h.b16 %v114
    %v252 = vunpack.c.l.b16 %v115
    %v253 = vunpack.c.h.b16 %v115
    %v254 = vunpack.c.l.b16 %v116
    %v255 = vunpack.c.h.b16 %v116
    %v256 = vunpack.c.l.b16 %v117
    %v257 = vunpack.c.h.b16 %v117
    %v258 = vunpack.c.l.b16 %v118
    %v259 = vunpack.c.h.b16 %v118
    %v260 = vunpack.c.l.b16 %v119
    %v261 = vunpack.c.h.b16 %v119
    %v262 = vpack.c.b16 %v202, %v198
    %v263 = vpack.c.b16 %v203, %v199
    %v264 = vpack.c.b16 %v204, %v200
    %v265 = vpack.c.b16 %v205, %v201
    %v266 = vpack.c.b16 %v210, %v206
    %v267 = vpack.c.b16 %v211, %v207
    %v268 = vpack.c.b16 %v212, %v208
    %v269 = vpack.c.b16 %v213, %v209
    %v270 = vpack.c.b16 %v218, %v214
    %v271 = vpack.c.b16 %v219, %v215
    %v272 = vpack.c.b16 %v220, %v216
    %v273 = vpack.c.b16 %v221, %v217
    %v274 = vpack.c.b16 %v226, %v222
    %v275 = vpack.c.b16 %v227, %v223
    %v276 = vpack.c.b16 %v228, %v224
    %v277 = vpack.c.b16 %v229, %v225
    %v278 = vpack.c.b16 %v234, %v230
    %v279 = vpack.c.b16 %v235, %v231
    %v280 = vpack.c.b16 %v236, %v232
    %v281 = vpack.c.b16 %v237, %v233
    %v282 = vpack.c.b16 %v242, %v238
    %v283 = vpack.c.b16 %v243, %v239
    %v284 = vpack.c.b16 %v244, %v240
    %v285 = vpack.c.b16 %v245, %v241
    %v286 = vpack.c.b16 %v250, %v246
    %v287 = vpack.c.b16 %v251, %v247
    %v288 = vpack.c.b16 %v252, %v248
    %v289 = vpack.c.b16 %v253, %v249
    %v290 = vpack.c.b16 %v258, %v254
    %v291 = vpack.c.b16 %v259, %v255
    %v292 = vpack.c.b16 %v260, %v256
    %v293 = vpack.c.b16 %v261, %v257
    %326 = vmatprep.subr.bf16.mxu0 %v263
    %327 = vmatpush1.bf16.msra.mxu0 %v262
    %328 = vmatprep.subr.bf16.mxu0 %v267
    %329 = vmatpush1.bf16.msra.mxu0 %v266
    %330 = vmatprep.subr.bf16.mxu0 %v271
    %331 = vmatpush1.bf16.msra.mxu0 %v270
    %332 = vmatprep.subr.bf16.mxu0 %v275
    %333 = vmatpush1.bf16.msra.mxu0 %v274
    %334 = vmatprep.subr.bf16.mxu0 %v279
    %335 = vmatpush1.bf16.msra.mxu0 %v278
    %336 = vmatprep.subr.bf16.mxu0 %v283
    %337 = vmatpush1.bf16.msra.mxu0 %v282
    %338 = vmatprep.subr.bf16.mxu0 %v287
    %339 = vmatpush1.bf16.msra.mxu0 %v286
    %340 = vmatprep.subr.bf16.mxu0 %v291
    %341 = vmatpush1.bf16.msra.mxu0 %v290
    %342 = vmatprep.subr.bf16.mxu0 0
    %343 = vmatpush1.bf16.msra.mxu0 0
    %344 = vmatprep.subr.bf16.mxu0 0
    %345 = vmatpush1.bf16.msra.mxu0 0
    %346 = vmatprep.subr.bf16.mxu0 0
    %347 = vmatpush1.bf16.msra.mxu0 0
    %348 = vmatprep.subr.bf16.mxu0 0
    %349 = vmatpush1.bf16.msra.mxu0 0
    %350 = vmatprep.subr.bf16.mxu0 0
    %351 = vmatpush1.bf16.msra.mxu0 0
    %352 = vmatprep.subr.bf16.mxu0 0
    %353 = vmatpush1.bf16.msra.mxu0 0
    %354 = vmatprep.subr.bf16.mxu0 0
    %355 = vmatpush1.bf16.msra.mxu0 0
    %356 = vmatprep.subr.bf16.mxu0 0
    %357 = vmatpush1.bf16.msra.mxu0 0
    %358 = vmatprep.mubr.bf16.mxu0 0
    %359 = vmatmul.mubr.bf16.gmra.mrb[0].mxu0 %v158
    %v360 = vpop.f32.mrb[0].mxu0
    %v361 = vadd.f32 %v125, %v360
    %v362 = vpop.f32.mrb[0].mxu0
    %v363 = vadd.f32 %v129, %v362
    %v364 = vpop.f32.mrb[0].mxu0
    %v365 = vadd.f32 %v125, %v364
    %v366 = vpop.f32.mrb[0].mxu0
    %v367 = vadd.f32 %v129, %v366
    %368 = vmatprep.mubr.bf16.mxu0 0
    %369 = vmatmul.mubr.bf16.gmra.mrb[0].mxu0 %v159
    %v370 = vpop.f32.mrb[0].mxu0
    %v371 = vadd.f32 %v125, %v370
    %v372 = vpop.f32.mrb[0].mxu0
    %v373 = vadd.f32 %v129, %v372
    %v374 = vpop.f32.mrb[0].mxu0
    %v375 = vadd.f32 %v125, %v374
    %v376 = vpop.f32.mrb[0].mxu0
    %v377 = vadd.f32 %v129, %v376
    %378 = vmatprep.mubr.bf16.mxu0 0
    %379 = vmatmul.mubr.bf16.gmra.mrb[0].mxu0 %v160
    %v380 = vpop.f32.mrb[0].mxu0
    %v381 = vadd.f32 %v125, %v380
    %v382 = vpop.f32.mrb[0].mxu0
    %v383 = vadd.f32 %v129, %v382
    %v384 = vpop.f32.mrb[0].mxu0
    %v385 = vadd.f32 %v125, %v384
    %v386 = vpop.f32.mrb[0].mxu0
    %v387 = vadd.f32 %v129, %v386
    %388 = vmatprep.mubr.bf16.mxu0 0
    %389 = vmatmul.mubr.bf16.gmra.mrb[0].mxu0 %v161
    %v390 = vpop.f32.mrb[0].mxu0
    %v391 = vadd.f32 %v125, %v390
    %v392 = vpop.f32.mrb[0].mxu0
    %v393 = vadd.f32 %v129, %v392
    %v394 = vpop.f32.mrb[0].mxu0
    %v395 = vadd.f32 %v125, %v394
    %v396 = vpop.f32.mrb[0].mxu0
    %v397 = vadd.f32 %v129, %v396
    %398 = vdwg.mxu0
    %399 = vmatprep.subr.bf16.mxu0 %v265
    %400 = vmatpush1.bf16.msra.mxu0 %v264
    %401 = vmatprep.subr.bf16.mxu0 %v269
    %402 = vmatpush1.bf16.msra.mxu0 %v268
    %403 = vmatprep.subr.bf16.mxu0 %v273
    %404 = vmatpush1.bf16.msra.mxu0 %v272
    %405 = vmatprep.subr.bf16.mxu0 %v277
    %406 = vmatpush1.bf16.msra.mxu0 %v276
    %407 = vmatprep.subr.bf16.mxu0 %v281
    %408 = vmatpush1.bf16.msra.mxu0 %v280
    %409 = vmatprep.subr.bf16.mxu0 %v285
    %410 = vmatpush1.bf16.msra.mxu0 %v284
    %411 = vmatprep.subr.bf16.mxu0 %v289
    %412 = vmatpush1.bf16.msra.mxu0 %v288
    %413 = vmatprep.subr.bf16.mxu0 %v293
    %414 = vmatpush1.bf16.msra.mxu0 %v292
    %415 = vmatprep.subr.bf16.mxu0 0
    %416 = vmatpush1.bf16.msra.mxu0 0
    %417 = vmatprep.subr.bf16.mxu0 0
    %418 = vmatpush1.bf16.msra.mxu0 0
    %419 = vmatprep.subr.bf16.mxu0 0
    %420 = vmatpush1.bf16.msra.mxu0 0
    %421 = vmatprep.subr.bf16.mxu0 0
    %422 = vmatpush1.bf16.msra.mxu0 0
    %423 = vmatprep.subr.bf16.mxu0 0
    %424 = vmatpush1.bf16.msra.mxu0 0
    %425 = vmatprep.subr.bf16.mxu0 0
    %426 = vmatpush1.bf16.msra.mxu0 0
    %427 = vmatprep.subr.bf16.mxu0 0
    %428 = vmatpush1.bf16.msra.mxu0 0
    %429 = vmatprep.subr.bf16.mxu0 0
    %430 = vmatpush1.bf16.msra.mxu0 0
    %431 = vmatprep.mubr.bf16.mxu0 0
    %432 = vmatmul.mubr.bf16.gmra.mrb[0].mxu0 %v158
    %v433 = vpop.f32.mrb[0].mxu0
    %v434 = vadd.f32 %v133, %v433
    %v435 = vpop.f32.mrb[0].mxu0
    %v436 = vadd.f32 %v137, %v435
    %v437 = vpop.f32.mrb[0].mxu0
    %v438 = vadd.f32 %v133, %v437
    %v439 = vpop.f32.mrb[0].mxu0
    %v440 = vadd.f32 %v137, %v439
    %441 = vmatprep.mubr.bf16.mxu0 0
    %442 = vmatmul.mubr.bf16.gmra.mrb[0].mxu0 %v159
    %v443 = vpop.f32.mrb[0].mxu0
    %v444 = vadd.f32 %v133, %v443
    %v445 = vpop.f32.mrb[0].mxu0
    %v446 = vadd.f32 %v137, %v445
    %v447 = vpop.f32.mrb[0].mxu0
    %v448 = vadd.f32 %v133, %v447
    %v449 = vpop.f32.mrb[0].mxu0
    %v450 = vadd.f32 %v137, %v449
    %451 = vmatprep.mubr.bf16.mxu0 0
    %452 = vmatmul.mubr.bf16.gmra.mrb[0].mxu0 %v160
    %v453 = vpop.f32.mrb[0].mxu0
    %v454 = vadd.f32 %v133, %v453
    %v455 = vpop.f32.mrb[0].mxu0
    %v456 = vadd.f32 %v137, %v455
    %v457 = vpop.f32.mrb[0].mxu0
    %v458 = vadd.f32 %v133, %v457
    %v459 = vpop.f32.mrb[0].mxu0
    %v460 = vadd.f32 %v137, %v459
    %461 = vmatprep.mubr.bf16.mxu0 0
    %462 = vmatmul.mubr.bf16.gmra.mrb[0].mxu0 %v161
    %v463 = vpop.f32.mrb[0].mxu0
    %v464 = vadd.f32 %v133, %v463
    %v465 = vpop.f32.mrb[0].mxu0
    %v466 = vadd.f32 %v137, %v465
    %v467 = vpop.f32.mrb[0].mxu0
    %v468 = vadd.f32 %v133, %v467
    %v469 = vpop.f32.mrb[0].mxu0
    %v470 = vadd.f32 %v137, %v469
    %471 = vdwg.mxu0
    %472 = vst [vmem:[#allocation2] sm:$0xff] %v361
    %473 = vst [vmem:[#allocation2 + $0x8] sm:$0xff] %v363
    %474 = vst [vmem:[#allocation2 + $0x10] sm:$0xff] %v434
    %475 = vst [vmem:[#allocation2 + $0x18] sm:$0xff] %v436
    %476 = vst [vmem:[#allocation2 + $0x20] sm:$0xff] %v365
    %477 = vst [vmem:[#allocation2 + $0x28] sm:$0xff] %v367
    %478 = vst [vmem:[#allocation2 + $0x30] sm:$0xff] %v438
    %479 = vst [vmem:[#allocation2 + $0x38] sm:$0xff] %v440
    %480 = vst [vmem:[#allocation2 + $0x40] sm:$0xff] %v371
    %481 = vst [vmem:[#allocation2 + $0x48] sm:$0xff] %v373
    %482 = vst [vmem:[#allocation2 + $0x50] sm:$0xff] %v444
    %483 = vst [vmem:[#allocation2 + $0x58] sm:$0xff] %v446
    %484 = vst [vmem:[#allocation2 + $0x60] sm:$0xff] %v375
    %485 = vst [vmem:[#allocation2 + $0x68] sm:$0xff] %v377
    %486 = vst [vmem:[#allocation2 + $0x70] sm:$0xff] %v448
    %487 = vst [vmem:[#allocation2 + $0x78] sm:$0xff] %v450
    %488 = vst [vmem:[#allocation2 + $0x80] sm:$0xff] %v381
    %489 = vst [vmem:[#allocation2 + $0x88] sm:$0xff] %v383
    %490 = vst [vmem:[#allocation2 + $0x90] sm:$0xff] %v454
    %491 = vst [vmem:[#allocation2 + $0x98] sm:$0xff] %v456
    %492 = vst [vmem:[#allocation2 + $0xa0] sm:$0xff] %v385
    %493 = vst [vmem:[#allocation2 + $0xa8] sm:$0xff] %v387
    %494 = vst [vmem:[#allocation2 + $0xb0] sm:$0xff] %v458
    %495 = vst [vmem:[#allocation2 + $0xb8] sm:$0xff] %v460
    %496 = vst [vmem:[#allocation2 + $0xc0] sm:$0xff] %v391
    %497 = vst [vmem:[#allocation2 + $0xc8] sm:$0xff] %v393
    %498 = vst [vmem:[#allocation2 + $0xd0] sm:$0xff] %v464
    %499 = vst [vmem:[#allocation2 + $0xd8] sm:$0xff] %v466
    %500 = vst [vmem:[#allocation2 + $0xe0] sm:$0xff] %v395
    %501 = vst [vmem:[#allocation2 + $0xe8] sm:$0xff] %v397
    %502 = vst [vmem:[#allocation2 + $0xf0] sm:$0xff] %v468
    %503 = vst [vmem:[#allocation2 + $0xf8] sm:$0xff] %v470
    %v504 = vld [vmem:[#allocation8] sm:$0xff]
    %v505 = vld [vmem:[#allocation8 + $0x8] sm:$0xff]
    %v506 = vld [vmem:[#allocation8 + $0x10] sm:$0xff]
    %v507 = vld [vmem:[#allocation8 + $0x18] sm:$0xff]
    %v508 = vld [vmem:[#allocation8 + $0x20] sm:$0xff]
    %v509 = vld [vmem:[#allocation8 + $0x28] sm:$0xff]
    %v510 = vld [vmem:[#allocation8 + $0x30] sm:$0xff]
    %v511 = vld [vmem:[#allocation8 + $0x38] sm:$0xff]
    %v512 = vld [vmem:[#allocation8 + $0x40] sm:$0xff]
    %v513 = vld [vmem:[#allocation8 + $0x48] sm:$0xff]
    %v514 = vld [vmem:[#allocation8 + $0x50] sm:$0xff]
    %v515 = vld [vmem:[#allocation8 + $0x58] sm:$0xff]
    %v516 = vld [vmem:[#allocation8 + $0x60] sm:$0xff]
    %v517 = vld [vmem:[#allocation8 + $0x68] sm:$0xff]
    %v518 = vld [vmem:[#allocation8 + $0x70] sm:$0xff]
    %v519 = vld [vmem:[#allocation8 + $0x78] sm:$0xff]
    %v520 = vld [vmem:[#allocation8 + $0x80] sm:$0xff]
    %v521 = vld [vmem:[#allocation8 + $0x88] sm:$0xff]
    %v522 = vld [vmem:[#allocation8 + $0x90] sm:$0xff]
    %v523 = vld [vmem:[#allocation8 + $0x98] sm:$0xff]
    %v524 = vld [vmem:[#allocation8 + $0xa0] sm:$0xff]
    %v525 = vld [vmem:[#allocation8 + $0xa8] sm:$0xff]
    %v526 = vld [vmem:[#allocation8 + $0xb0] sm:$0xff]
    %v527 = vld [vmem:[#allocation8 + $0xb8] sm:$0xff]
    %v528 = vld [vmem:[#allocation8 + $0xc0] sm:$0xff]
    %v529 = vld [vmem:[#allocation8 + $0xc8] sm:$0xff]
    %v530 = vld [vmem:[#allocation8 + $0xd0] sm:$0xff]
    %v531 = vld [vmem:[#allocation8 + $0xd8] sm:$0xff]
    %v532 = vld [vmem:[#allocation8 + $0xe0] sm:$0xff]
    %v533 = vld [vmem:[#allocation8 + $0xe8] sm:$0xff]
    %v534 = vld [vmem:[#allocation8 + $0xf0] sm:$0xff]
    %v535 = vld [vmem:[#allocation8 + $0xf8] sm:$0xff]
    %s536 = smul.u32 0, 4
    %s537 = smul.addr %s536, 8
    %s538 = scalar_lea.vmem [#allocation2], %s537
    %v539 = vld [vmem:[%s538] sm:$0xff]
    %v540 = vld [vmem:[%s538 + $0x8] sm:$0xff]
    %v541 = vld [vmem:[%s538 + $0x10] sm:$0xff]
    %v542 = vld [vmem:[%s538 + $0x18] sm:$0xff]
    %v575 = vunpack.c.l.b16 %v504
    %v576 = vunpack.c.h.b16 %v504
    %v577 = vunpack.c.l.b16 %v505
    %v578 = vunpack.c.h.b16 %v505
    %v579 = vunpack.c.l.b16 %v506
    %v580 = vunpack.c.h.b16 %v506
    %v581 = vunpack.c.l.b16 %v507
    %v582 = vunpack.c.h.b16 %v507
    %v583 = vunpack.c.l.b16 %v508
    %v584 = vunpack.c.h.b16 %v508
    %v585 = vunpack.c.l.b16 %v509
    %v586 = vunpack.c.h.b16 %v509
    %v587 = vunpack.c.l.b16 %v510
    %v588 = vunpack.c.h.b16 %v510
    %v589 = vunpack.c.l.b16 %v511
    %v590 = vunpack.c.h.b16 %v511
    %v591 = vunpack.c.l.b16 %v512
    %v592 = vunpack.c.h.b16 %v512
    %v593 = vunpack.c.l.b16 %v513
    %v594 = vunpack.c.h.b16 %v513
    %v595 = vunpack.c.l.b16 %v514
    %v596 = vunpack.c.h.b16 %v514
    %v597 = vunpack.c.l.b16 %v515
    %v598 = vunpack.c.h.b16 %v515
    %v599 = vunpack.c.l.b16 %v516
    %v600 = vunpack.c.h.b16 %v516
    %v601 = vunpack.c.l.b16 %v517
    %v602 = vunpack.c.h.b16 %v517
    %v603 = vunpack.c.l.b16 %v518
    %v604 = vunpack.c.h.b16 %v518
    %v605 = vunpack.c.l.b16 %v519
    %v606 = vunpack.c.h.b16 %v519
    %v607 = vunpack.c.l.b16 %v520
    %v608 = vunpack.c.h.b16 %v520
    %v609 = vunpack.c.l.b16 %v521
    %v610 = vunpack.c.h.b16 %v521
    %v611 = vunpack.c.l.b16 %v522
    %v612 = vunpack.c.h.b16 %v522
    %v613 = vunpack.c.l.b16 %v523
    %v614 = vunpack.c.h.b16 %v523
    %v615 = vunpack.c.l.b16 %v524
    %v616 = vunpack.c.h.b16 %v524
    %v617 = vunpack.c.l.b16 %v525
    %v618 = vunpack.c.h.b16 %v525
    %v619 = vunpack.c.l.b16 %v526
    %v620 = vunpack.c.h.b16 %v526
    %v621 = vunpack.c.l.b16 %v527
    %v622 = vunpack.c.h.b16 %v527
    %v623 = vunpack.c.l.b16 %v528
    %v624 = vunpack.c.h.b16 %v528
    %v625 = vunpack.c.l.b16 %v529
    %v626 = vunpack.c.h.b16 %v529
    %v627 = vunpack.c.l.b16 %v530
    %v628 = vunpack.c.h.b16 %v530
    %v629 = vunpack.c.l.b16 %v531
    %v630 = vunpack.c.h.b16 %v531
    %v631 = vunpack.c.l.b16 %v532
    %v632 = vunpack.c.h.b16 %v532
    %v633 = vunpack.c.l.b16 %v533
    %v634 = vunpack.c.h.b16 %v533
    %v635 = vunpack.c.l.b16 %v534
    %v636 = vunpack.c.h.b16 %v534
    %v637 = vunpack.c.l.b16 %v535
    %v638 = vunpack.c.h.b16 %v535
    %v639 = vpack.c.b16 %v579, %v575
    %v640 = vpack.c.b16 %v580, %v576
    %v641 = vpack.c.b16 %v581, %v577
    %v642 = vpack.c.b16 %v582, %v578
    %v643 = vpack.c.b16 %v587, %v583
    %v644 = vpack.c.b16 %v588, %v584
    %v645 = vpack.c.b16 %v589, %v585
    %v646 = vpack.c.b16 %v590, %v586
    %v647 = vpack.c.b16 %v595, %v591
    %v648 = vpack.c.b16 %v596, %v592
    %v649 = vpack.c.b16 %v597, %v593
    %v650 = vpack.c.b16 %v598, %v594
    %v651 = vpack.c.b16 %v603, %v599
    %v652 = vpack.c.b16 %v604, %v600
    %v653 = vpack.c.b16 %v605, %v601
    %v654 = vpack.c.b16 %v606, %v602
    %v655 = vpack.c.b16 %v611, %v607
    %v656 = vpack.c.b16 %v612, %v608
    %v657 = vpack.c.b16 %v613, %v609
    %v658 = vpack.c.b16 %v614, %v610
    %v659 = vpack.c.b16 %v619, %v615
    %v660 = vpack.c.b16 %v620, %v616
    %v661 = vpack.c.b16 %v621, %v617
    %v662 = vpack.c.b16 %v622, %v618
    %v663 = vpack.c.b16 %v627, %v623
    %v664 = vpack.c.b16 %v628, %v624
    %v665 = vpack.c.b16 %v629, %v625
    %v666 = vpack.c.b16 %v630, %v626
    %v667 = vpack.c.b16 %v635, %v631
    %v668 = vpack.c.b16 %v636, %v632
    %v669 = vpack.c.b16 %v637, %v633
    %v670 = vpack.c.b16 %v638, %v634
    %703 = vmatprep.subr.bf16.mxu0 %v640
    %704 = vmatpush1.bf16.msra.mxu0 %v639
    %705 = vmatprep.subr.bf16.mxu0 %v644
    %706 = vmatpush1.bf16.msra.mxu0 %v643
    %707 = vmatprep.subr.bf16.mxu0 %v648
    %708 = vmatpush1.bf16.msra.mxu0 %v647
    %709 = vmatprep.subr.bf16.mxu0 %v652
    %710 = vmatpush1.bf16.msra.mxu0 %v651
    %711 = vmatprep.subr.bf16.mxu0 %v656
    %712 = vmatpush1.bf16.msra.mxu0 %v655
    %713 = vmatprep.subr.bf16.mxu0 %v660
    %714 = vmatpush1.bf16.msra.mxu0 %v659
    %715 = vmatprep.subr.bf16.mxu0 %v664
    %716 = vmatpush1.bf16.msra.mxu0 %v663
    %717 = vmatprep.subr.bf16.mxu0 %v668
    %718 = vmatpush1.bf16.msra.mxu0 %v667
    %719 = vmatprep.subr.bf16.mxu0 0
    %720 = vmatpush1.bf16.msra.mxu0 0
    %721 = vmatprep.subr.bf16.mxu0 0
    %722 = vmatpush1.bf16.msra.mxu0 0
    %723 = vmatprep.subr.bf16.mxu0 0
    %724 = vmatpush1.bf16.msra.mxu0 0
    %725 = vmatprep.subr.bf16.mxu0 0
    %726 = vmatpush1.bf16.msra.mxu0 0
    %727 = vmatprep.subr.bf16.mxu0 0
    %728 = vmatpush1.bf16.msra.mxu0 0
    %729 = vmatprep.subr.bf16.mxu0 0
    %730 = vmatpush1.bf16.msra.mxu0 0
    %731 = vmatprep.subr.bf16.mxu0 0
    %732 = vmatpush1.bf16.msra.mxu0 0
    %733 = vmatprep.subr.bf16.mxu0 0
    %734 = vmatpush1.bf16.msra.mxu0 0
    %735 = vmatprep.mubr.bf16.mxu0 0
    %736 = vmatmul.mubr.bf16.gmra.mrb[0].mxu0 0
    %v737 = vpop.f32.mrb[0].mxu0
    %v738 = vadd.f32 0.0, %v737
    %v739 = vpop.f32.mrb[0].mxu0
    %v740 = vadd.f32 0.0, %v739
    %v741 = vpop.f32.mrb[0].mxu0
    %v742 = vpop.f32.mrb[0].mxu0
    %743 = vdwg.mxu0
    %744 = vmatprep.subr.bf16.mxu0 %v642
    %745 = vmatpush1.bf16.msra.mxu0 %v641
    %746 = vmatprep.subr.bf16.mxu0 %v646
    %747 = vmatpush1.bf16.msra.mxu0 %v645
    %748 = vmatprep.subr.bf16.mxu0 %v650
    %749 = vmatpush1.bf16.msra.mxu0 %v649
    %750 = vmatprep.subr.bf16.mxu0 %v654
    %751 = vmatpush1.bf16.msra.mxu0 %v653
    %752 = vmatprep.subr.bf16.mxu0 %v658
    %753 = vmatpush1.bf16.msra.mxu0 %v657
    %754 = vmatprep.subr.bf16.mxu0 %v662
    %755 = vmatpush1.bf16.msra.mxu0 %v661
    %756 = vmatprep.subr.bf16.mxu0 %v666
    %757 = vmatpush1.bf16.msra.mxu0 %v665
    %758 = vmatprep.subr.bf16.mxu0 %v670
    %759 = vmatpush1.bf16.msra.mxu0 %v669
    %760 = vmatprep.subr.bf16.mxu0 0
    %761 = vmatpush1.bf16.msra.mxu0 0
    %762 = vmatprep.subr.bf16.mxu0 0
    %763 = vmatpush1.bf16.msra.mxu0 0
    %764 = vmatprep.subr.bf16.mxu0 0
    %765 = vmatpush1.bf16.msra.mxu0 0
    %766 = vmatprep.subr.bf16.mxu0 0
    %767 = vmatpush1.bf16.msra.mxu0 0
    %768 = vmatprep.subr.bf16.mxu0 0
    %769 = vmatpush1.bf16.msra.mxu0 0
    %770 = vmatprep.subr.bf16.mxu0 0
    %771 = vmatpush1.bf16.msra.mxu0 0
    %772 = vmatprep.subr.bf16.mxu0 0
    %773 = vmatpush1.bf16.msra.mxu0 0
    %774 = vmatprep.subr.bf16.mxu0 0
    %775 = vmatpush1.bf16.msra.mxu0 0
    %776 = vmatprep.mubr.bf16.mxu0 0
    %777 = vmatmul.mubr.bf16.gmra.mrb[0].mxu0 0
    %v778 = vpop.f32.mrb[0].mxu0
    %v779 = vadd.f32 0.0, %v778
    %v780 = vpop.f32.mrb[0].mxu0
    %v781 = vadd.f32 0.0, %v780
    %v782 = vpop.f32.mrb[0].mxu0
    %v783 = vpop.f32.mrb[0].mxu0
    %784 = vdwg.mxu0
    %v785 = vadd.f32 %v539, %v738
    %v786 = vadd.f32 %v540, %v740
    %v787 = vadd.f32 %v541, %v779
    %v788 = vadd.f32 %v542, %v781
    %v789 = vtanh.pop %v785
    %v790 = vtanh.pop %v786
    %v791 = vtanh.pop %v787
    %v792 = vtanh.pop %v788
    %v793 = vmul.f32 %v789, 0.5
    %v794 = vadd.f32 %v793, 0.5
    %v795 = vmul.f32 %v790, 0.5
    %v796 = vadd.f32 %v795, 0.5
    %v797 = vmul.f32 %v791, 0.5
    %v798 = vadd.f32 %v797, 0.5
    %v799 = vmul.f32 %v796, 0.0
    %v800 = vmul.f32 %v794, %v792
    %v801 = vadd.f32 %v799, %v800
    %v802 = vtanh.pop %v801
    %v803 = vmul.f32 %v798, %v802
    %s804 = smul.u32 1, 4
    %s805 = smul.addr %s804, 8
    %s806 = scalar_lea.vmem [#allocation2], %s805
    %v807 = vld [vmem:[%s806] sm:$0xff]
    %v808 = vld [vmem:[%s806 + $0x8] sm:$0xff]
    %v809 = vld [vmem:[%s806 + $0x10] sm:$0xff]
    %v810 = vld [vmem:[%s806 + $0x18] sm:$0xff]
    %v811 = vpack.c.bf16 %v803, %v803
    %812 = vmatprep.subr.bf16.mxu0 %v640
    %813 = vmatpush1.bf16.msra.mxu0 %v639
    %814 = vmatprep.subr.bf16.mxu0 %v644
    %815 = vmatpush1.bf16.msra.mxu0 %v643
    %816 = vmatprep.subr.bf16.mxu0 %v648
    %817 = vmatpush1.bf16.msra.mxu0 %v647
    %818 = vmatprep.subr.bf16.mxu0 %v652
    %819 = vmatpush1.bf16.msra.mxu0 %v651
    %820 = vmatprep.subr.bf16.mxu0 %v656
    %821 = vmatpush1.bf16.msra.mxu0 %v655
    %822 = vmatprep.subr.bf16.mxu0 %v660
    %823 = vmatpush1.bf16.msra.mxu0 %v659
    %824 = vmatprep.subr.bf16.mxu0 %v664
    %825 = vmatpush1.bf16.msra.mxu0 %v663
    %826 = vmatprep.subr.bf16.mxu0 %v668
    %827 = vmatpush1.bf16.msra.mxu0 %v667
    %828 = vmatprep.subr.bf16.mxu0 0
    %829 = vmatpush1.bf16.msra.mxu0 0
    %830 = vmatprep.subr.bf16.mxu0 0
    %831 = vmatpush1.bf16.msra.mxu0 0
    %832 = vmatprep.subr.bf16.mxu0 0
    %833 = vmatpush1.bf16.msra.mxu0 0
    %834 = vmatprep.subr.bf16.mxu0 0
    %835 = vmatpush1.bf16.msra.mxu0 0
    %836 = vmatprep.subr.bf16.mxu0 0
    %837 = vmatpush1.bf16.msra.mxu0 0
    %838 = vmatprep.subr.bf16.mxu0 0
    %839 = vmatpush1.bf16.msra.mxu0 0
    %840 = vmatprep.subr.bf16.mxu0 0
    %841 = vmatpush1.bf16.msra.mxu0 0
    %842 = vmatprep.subr.bf16.mxu0 0
    %843 = vmatpush1.bf16.msra.mxu0 0
    %844 = vmatprep.mubr.bf16.mxu0 0
    %845 = vmatmul.mubr.bf16.gmra.mrb[0].mxu0 %v811
    %v846 = vpop.f32.mrb[0].mxu0
    %v847 = vadd.f32 0.0, %v846
    %v848 = vpop.f32.mrb[0].mxu0
    %v849 = vadd.f32 0.0, %v848
    %v850 = vpop.f32.mrb[0].mxu0
    %v851 = vpop.f32.mrb[0].mxu0
    %852 = vdwg.mxu0
    %853 = vmatprep.subr.bf16.mxu0 %v642
    %854 = vmatpush1.bf16.msra.mxu0 %v641
    %855 = vmatprep.subr.bf16.mxu0 %v646
    %856 = vmatpush1.bf16.msra.mxu0 %v645
    %857 = vmatprep.subr.bf16.mxu0 %v650
    %858 = vmatpush1.bf16.msra.mxu0 %v649
    %859 = vmatprep.subr.bf16.mxu0 %v654
    %860 = vmatpush1.bf16.msra.mxu0 %v653
    %861 = vmatprep.subr.bf16.mxu0 %v658
    %862 = vmatpush1.bf16.msra.mxu0 %v657
    %863 = vmatprep.subr.bf16.mxu0 %v662
    %864 = vmatpush1.bf16.msra.mxu0 %v661
    %865 = vmatprep.subr.bf16.mxu0 %v666
    %866 = vmatpush1.bf16.msra.mxu0 %v665
    %867 = vmatprep.subr.bf16.mxu0 %v670
    %868 = vmatpush1.bf16.msra.mxu0 %v669
    %869 = vmatprep.subr.bf16.mxu0 0
    %870 = vmatpush1.bf16.msra.mxu0 0
    %871 = vmatprep.subr.bf16.mxu0 0
    %872 = vmatpush1.bf16.msra.mxu0 0
    %873 = vmatprep.subr.bf16.mxu0 0
    %874 = vmatpush1.bf16.msra.mxu0 0
    %875 = vmatprep.subr.bf16.mxu0 0
    %876 = vmatpush1.bf16.msra.mxu0 0
    %877 = vmatprep.subr.bf16.mxu0 0
    %878 = vmatpush1.bf16.msra.mxu0 0
    %879 = vmatprep.subr.bf16.mxu0 0
    %880 = vmatpush1.bf16.msra.mxu0 0
    %881 = vmatprep.subr.bf16.mxu0 0
    %882 = vmatpush1.bf16.msra.mxu0 0
    %883 = vmatprep.subr.bf16.mxu0 0
    %884 = vmatpush1.bf16.msra.mxu0 0
    %885 = vmatprep.mubr.bf16.mxu0 0
    %886 = vmatmul.mubr.bf16.gmra.mrb[0].mxu0 %v811
    %v887 = vpop.f32.mrb[0].mxu0
    %v888 = vadd.f32 0.0, %v887
    %v889 = vpop.f32.mrb[0].mxu0
    %v890 = vadd.f32 0.0, %v889
    %v891 = vpop.f32.mrb[0].mxu0
    %v892 = vpop.f32.mrb[0].mxu0
    %893 = vdwg.mxu0
    %v894 = vadd.f32 %v807, %v847
    %v895 = vadd.f32 %v808, %v849
    %v896 = vadd.f32 %v809, %v888
    %v897 = vadd.f32 %v810, %v890
    %v898 = vtanh.pop %v894
    %v899 = vtanh.pop %v895
    %v900 = vtanh.pop %v896
    %v901 = vtanh.pop %v897
    %v902 = vmul.f32 %v898, 0.5
    %v903 = vadd.f32 %v902, 0.5
    %v904 = vmul.f32 %v899, 0.5
    %v905 = vadd.f32 %v904, 0.5
    %v906 = vmul.f32 %v900, 0.5
    %v907 = vadd.f32 %v906, 0.5
    %v908 = vmul.f32 %v905, %v801
    %v909 = vmul.f32 %v903, %v901
    %v910 = vadd.f32 %v908, %v909
    %v911 = vtanh.pop %v910
    %v912 = vmul.f32 %v907, %v911
    %s913 = smul.u32 2, 4
    %s914 = smul.addr %s913, 8
    %s915 = scalar_lea.vmem [#allocation2], %s914
    %v916 = vld [vmem:[%s915] sm:$0xff]
    %v917 = vld [vmem:[%s915 + $0x8] sm:$0xff]
    %v918 = vld [vmem:[%s915 + $0x10] sm:$0xff]
    %v919 = vld [vmem:[%s915 + $0x18] sm:$0xff]
    %v920 = vpack.c.bf16 %v912, %v912
    %921 = vmatprep.subr.bf16.mxu0 %v640
    %922 = vmatpush1.bf16.msra.mxu0 %v639
    %923 = vmatprep.subr.bf16.mxu0 %v644
    %924 = vmatpush1.bf16.msra.mxu0 %v643
    %925 = vmatprep.subr.bf16.mxu0 %v648
    %926 = vmatpush1.bf16.msra.mxu0 %v647
    %927 = vmatprep.subr.bf16.mxu0 %v652
    %928 = vmatpush1.bf16.msra.mxu0 %v651
    %929 = vmatprep.subr.bf16.mxu0 %v656
    %930 = vmatpush1.bf16.msra.mxu0 %v655
    %931 = vmatprep.subr.bf16.mxu0 %v660
    %932 = vmatpush1.bf16.msra.mxu0 %v659
    %933 = vmatprep.subr.bf16.mxu0 %v664
    %934 = vmatpush1.bf16.msra.mxu0 %v663
    %935 = vmatprep.subr.bf16.mxu0 %v668
    %936 = vmatpush1.bf16.msra.mxu0 %v667
    %937 = vmatprep.subr.bf16.mxu0 0
    %938 = vmatpush1.bf16.msra.mxu0 0
    %939 = vmatprep.subr.bf16.mxu0 0
    %940 = vmatpush1.bf16.msra.mxu0 0
    %941 = vmatprep.subr.bf16.mxu0 0
    %942 = vmatpush1.bf16.msra.mxu0 0
    %943 = vmatprep.subr.bf16.mxu0 0
    %944 = vmatpush1.bf16.msra.mxu0 0
    %945 = vmatprep.subr.bf16.mxu0 0
    %946 = vmatpush1.bf16.msra.mxu0 0
    %947 = vmatprep.subr.bf16.mxu0 0
    %948 = vmatpush1.bf16.msra.mxu0 0
    %949 = vmatprep.subr.bf16.mxu0 0
    %950 = vmatpush1.bf16.msra.mxu0 0
    %951 = vmatprep.subr.bf16.mxu0 0
    %952 = vmatpush1.bf16.msra.mxu0 0
    %953 = vmatprep.mubr.bf16.mxu0 0
    %954 = vmatmul.mubr.bf16.gmra.mrb[0].mxu0 %v920
    %v955 = vpop.f32.mrb[0].mxu0
    %v956 = vadd.f32 0.0, %v955
    %v957 = vpop.f32.mrb[0].mxu0
    %v958 = vadd.f32 0.0, %v957
    %v959 = vpop.f32.mrb[0].mxu0
    %v960 = vpop.f32.mrb[0].mxu0
    %961 = vdwg.mxu0
    %962 = vmatprep.subr.bf16.mxu0 %v642
    %963 = vmatpush1.bf16.msra.mxu0 %v641
    %964 = vmatprep.subr.bf16.mxu0 %v646
    %965 = vmatpush1.bf16.msra.mxu0 %v645
    %966 = vmatprep.subr.bf16.mxu0 %v650
    %967 = vmatpush1.bf16.msra.mxu0 %v649
    %968 = vmatprep.subr.bf16.mxu0 %v654
    %969 = vmatpush1.bf16.msra.mxu0 %v653
    %970 = vmatprep.subr.bf16.mxu0 %v658
    %971 = vmatpush1.bf16.msra.mxu0 %v657
    %972 = vmatprep.subr.bf16.mxu0 %v662
    %973 = vmatpush1.bf16.msra.mxu0 %v661
    %974 = vmatprep.subr.bf16.mxu0 %v666
    %975 = vmatpush1.bf16.msra.mxu0 %v665
    %976 = vmatprep.subr.bf16.mxu0 %v670
    %977 = vmatpush1.bf16.msra.mxu0 %v669
    %978 = vmatprep.subr.bf16.mxu0 0
    %979 = vmatpush1.bf16.msra.mxu0 0
    %980 = vmatprep.subr.bf16.mxu0 0
    %981 = vmatpush1.bf16.msra.mxu0 0
    %982 = vmatprep.subr.bf16.mxu0 0
    %983 = vmatpush1.bf16.msra.mxu0 0
    %984 = vmatprep.subr.bf16.mxu0 0
    %985 = vmatpush1.bf16.msra.mxu0 0
    %986 = vmatprep.subr.bf16.mxu0 0
    %987 = vmatpush1.bf16.msra.mxu0 0
    %988 = vmatprep.subr.bf16.mxu0 0
    %989 = vmatpush1.bf16.msra.mxu0 0
    %990 = vmatprep.subr.bf16.mxu0 0
    %991 = vmatpush1.bf16.msra.mxu0 0
    %992 = vmatprep.subr.bf16.mxu0 0
    %993 = vmatpush1.bf16.msra.mxu0 0
    %994 = vmatprep.mubr.bf16.mxu0 0
    %995 = vmatmul.mubr.bf16.gmra.mrb[0].mxu0 %v920
    %v996 = vpop.f32.mrb[0].mxu0
    %v997 = vadd.f32 0.0, %v996
    %v998 = vpop.f32.mrb[0].mxu0
    %v999 = vadd.f32 0.0, %v998
    %v1000 = vpop.f32.mrb[0].mxu0
    %v1001 = vpop.f32.mrb[0].mxu0
    %1002 = vdwg.mxu0
    %v1003 = vadd.f32 %v916, %v956
    %v1004 = vadd.f32 %v917, %v958
    %v1005 = vadd.f32 %v918, %v997
    %v1006 = vadd.f32 %v919, %v999
    %v1007 = vtanh.pop %v1003
    %v1008 = vtanh.pop %v1004
    %v1009 = vtanh.pop %v1005
    %v1010 = vtanh.pop %v1006
    %v1011 = vmul.f32 %v1007, 0.5
    %v1012 = vadd.f32 %v1011, 0.5
    %v1013 = vmul.f32 %v1008, 0.5
    %v1014 = vadd.f32 %v1013, 0.5
    %v1015 = vmul.f32 %v1009, 0.5
    %v1016 = vadd.f32 %v1015, 0.5
    %v1017 = vmul.f32 %v1014, %v910
    %v1018 = vmul.f32 %v1012, %v1010
    %v1019 = vadd.f32 %v1017, %v1018
    %v1020 = vtanh.pop %v1019
    %v1021 = vmul.f32 %v1016, %v1020
    %s1022 = smul.u32 3, 4
    %s1023 = smul.addr %s1022, 8
    %s1024 = scalar_lea.vmem [#allocation2], %s1023
    %v1025 = vld [vmem:[%s1024] sm:$0xff]
    %v1026 = vld [vmem:[%s1024 + $0x8] sm:$0xff]
    %v1027 = vld [vmem:[%s1024 + $0x10] sm:$0xff]
    %v1028 = vld [vmem:[%s1024 + $0x18] sm:$0xff]
    %v1029 = vpack.c.bf16 %v1021, %v1021
    %1030 = vmatprep.subr.bf16.mxu0 %v640
    %1031 = vmatpush1.bf16.msra.mxu0 %v639
    %1032 = vmatprep.subr.bf16.mxu0 %v644
    %1033 = vmatpush1.bf16.msra.mxu0 %v643
    %1034 = vmatprep.subr.bf16.mxu0 %v648
    %1035 = vmatpush1.bf16.msra.mxu0 %v647
    %1036 = vmatprep.subr.bf16.mxu0 %v652
    %1037 = vmatpush1.bf16.msra.mxu0 %v651
    %1038 = vmatprep.subr.bf16.mxu0 %v656
    %1039 = vmatpush1.bf16.msra.mxu0 %v655
    %1040 = vmatprep.subr.bf16.mxu0 %v660
    %1041 = vmatpush1.bf16.msra.mxu0 %v659
    %1042 = vmatprep.subr.bf16.mxu0 %v664
    %1043 = vmatpush1.bf16.msra.mxu0 %v663
    %1044 = vmatprep.subr.bf16.mxu0 %v668
    %1045 = vmatpush1.bf16.msra.mxu0 %v667
    %1046 = vmatprep.subr.bf16.mxu0 0
    %1047 = vmatpush1.bf16.msra.mxu0 0
    %1048 = vmatprep.subr.bf16.mxu0 0
    %1049 = vmatpush1.bf16.msra.mxu0 0
    %1050 = vmatprep.subr.bf16.mxu0 0
    %1051 = vmatpush1.bf16.msra.mxu0 0
    %1052 = vmatprep.subr.bf16.mxu0 0
    %1053 = vmatpush1.bf16.msra.mxu0 0
    %1054 = vmatprep.subr.bf16.mxu0 0
    %1055 = vmatpush1.bf16.msra.mxu0 0
    %1056 = vmatprep.subr.bf16.mxu0 0
    %1057 = vmatpush1.bf16.msra.mxu0 0
    %1058 = vmatprep.subr.bf16.mxu0 0
    %1059 = vmatpush1.bf16.msra.mxu0 0
    %1060 = vmatprep.subr.bf16.mxu0 0
    %1061 = vmatpush1.bf16.msra.mxu0 0
    %1062 = vmatprep.mubr.bf16.mxu0 0
    %1063 = vmatmul.mubr.bf16.gmra.mrb[0].mxu0 %v1029
    %v1064 = vpop.f32.mrb[0].mxu0
    %v1065 = vadd.f32 0.0, %v1064
    %v1066 = vpop.f32.mrb[0].mxu0
    %v1067 = vadd.f32 0.0, %v1066
    %v1068 = vpop.f32.mrb[0].mxu0
    %v1069 = vpop.f32.mrb[0].mxu0
    %1070 = vdwg.mxu0
    %1071 = vmatprep.subr.bf16.mxu0 %v642
    %1072 = vmatpush1.bf16.msra.mxu0 %v641
    %1073 = vmatprep.subr.bf16.mxu0 %v646
    %1074 = vmatpush1.bf16.msra.mxu0 %v645
    %1075 = vmatprep.subr.bf16.mxu0 %v650
    %1076 = vmatpush1.bf16.msra.mxu0 %v649
    %1077 = vmatprep.subr.bf16.mxu0 %v654
    %1078 = vmatpush1.bf16.msra.mxu0 %v653
    %1079 = vmatprep.subr.bf16.mxu0 %v658
    %1080 = vmatpush1.bf16.msra.mxu0 %v657
    %1081 = vmatprep.subr.bf16.mxu0 %v662
    %1082 = vmatpush1.bf16.msra.mxu0 %v661
    %1083 = vmatprep.subr.bf16.mxu0 %v666
    %1084 = vmatpush1.bf16.msra.mxu0 %v665
    %1085 = vmatprep.subr.bf16.mxu0 %v670
    %1086 = vmatpush1.bf16.msra.mxu0 %v669
    %1087 = vmatprep.subr.bf16.mxu0 0
    %1088 = vmatpush1.bf16.msra.mxu0 0
    %1089 = vmatprep.subr.bf16.mxu0 0
    %1090 = vmatpush1.bf16.msra.mxu0 0
    %1091 = vmatprep.subr.bf16.mxu0 0
    %1092 = vmatpush1.bf16.msra.mxu0 0
    %1093 = vmatprep.subr.bf16.mxu0 0
    %1094 = vmatpush1.bf16.msra.mxu0 0
    %1095 = vmatprep.subr.bf16.mxu0 0
    %1096 = vmatpush1.bf16.msra.mxu0 0
    %1097 = vmatprep.subr.bf16.mxu0 0
    %1098 = vmatpush1.bf16.msra.mxu0 0
    %1099 = vmatprep.subr.bf16.mxu0 0
    %1100 = vmatpush1.bf16.msra.mxu0 0
    %1101 = vmatprep.subr.bf16.mxu0 0
    %1102 = vmatpush1.bf16.msra.mxu0 0
    %1103 = vmatprep.mubr.bf16.mxu0 0
    %1104 = vmatmul.mubr.bf16.gmra.mrb[0].mxu0 %v1029
    %v1105 = vpop.f32.mrb[0].mxu0
    %v1106 = vadd.f32 0.0, %v1105
    %v1107 = vpop.f32.mrb[0].mxu0
    %v1108 = vadd.f32 0.0, %v1107
    %v1109 = vpop.f32.mrb[0].mxu0
    %v1110 = vpop.f32.mrb[0].mxu0
    %1111 = vdwg.mxu0
    %v1112 = vadd.f32 %v1025, %v1065
    %v1113 = vadd.f32 %v1026, %v1067
    %v1114 = vadd.f32 %v1027, %v1106
    %v1115 = vadd.f32 %v1028, %v1108
    %v1116 = vtanh.pop %v1112
    %v1117 = vtanh.pop %v1113
    %v1118 = vtanh.pop %v1114
    %v1119 = vtanh.pop %v1115
    %v1120 = vmul.f32 %v1116, 0.5
    %v1121 = vadd.f32 %v1120, 0.5
    %v1122 = vmul.f32 %v1117, 0.5
    %v1123 = vadd.f32 %v1122, 0.5
    %v1124 = vmul.f32 %v1118, 0.5
    %v1125 = vadd.f32 %v1124, 0.5
    %v1126 = vmul.f32 %v1123, %v1019
    %v1127 = vmul.f32 %v1121, %v1119
    %v1128 = vadd.f32 %v1126, %v1127
    %v1129 = vtanh.pop %v1128
    %v1130 = vmul.f32 %v1125, %v1129
    %s1131 = smul.u32 4, 4
    %s1132 = smul.addr %s1131, 8
    %s1133 = scalar_lea.vmem [#allocation2], %s1132
    %v1134 = vld [vmem:[%s1133] sm:$0xff]
    %v1135 = vld [vmem:[%s1133 + $0x8] sm:$0xff]
    %v1136 = vld [vmem:[%s1133 + $0x10] sm:$0xff]
    %v1137 = vld [vmem:[%s1133 + $0x18] sm:$0xff]
    %v1138 = vpack.c.bf16 %v1130, %v1130
    %1139 = vmatprep.subr.bf16.mxu0 %v640
    %1140 = vmatpush1.bf16.msra.mxu0 %v639
    %1141 = vmatprep.subr.bf16.mxu0 %v644
    %1142 = vmatpush1.bf16.msra.mxu0 %v643
    %1143 = vmatprep.subr.bf16.mxu0 %v648
    %1144 = vmatpush1.bf16.msra.mxu0 %v647
    %1145 = vmatprep.subr.bf16.mxu0 %v652
    %1146 = vmatpush1.bf16.msra.mxu0 %v651
    %1147 = vmatprep.subr.bf16.mxu0 %v656
    %1148 = vmatpush1.bf16.msra.mxu0 %v655
    %1149 = vmatprep.subr.bf16.mxu0 %v660
    %1150 = vmatpush1.bf16.msra.mxu0 %v659
    %1151 = vmatprep.subr.bf16.mxu0 %v664
    %1152 = vmatpush1.bf16.msra.mxu0 %v663
    %1153 = vmatprep.subr.bf16.mxu0 %v668
    %1154 = vmatpush1.bf16.msra.mxu0 %v667
    %1155 = vmatprep.subr.bf16.mxu0 0
    %1156 = vmatpush1.bf16.msra.mxu0 0
    %1157 = vmatprep.subr.bf16.mxu0 0
    %1158 = vmatpush1.bf16.msra.mxu0 0
    %1159 = vmatprep.subr.bf16.mxu0 0
    %1160 = vmatpush1.bf16.msra.mxu0 0
    %1161 = vmatprep.subr.bf16.mxu0 0
    %1162 = vmatpush1.bf16.msra.mxu0 0
    %1163 = vmatprep.subr.bf16.mxu0 0
    %1164 = vmatpush1.bf16.msra.mxu0 0
    %1165 = vmatprep.subr.bf16.mxu0 0
    %1166 = vmatpush1.bf16.msra.mxu0 0
    %1167 = vmatprep.subr.bf16.mxu0 0
    %1168 = vmatpush1.bf16.msra.mxu0 0
    %1169 = vmatprep.subr.bf16.mxu0 0
    %1170 = vmatpush1.bf16.msra.mxu0 0
    %1171 = vmatprep.mubr.bf16.mxu0 0
    %1172 = vmatmul.mubr.bf16.gmra.mrb[0].mxu0 %v1138
    %v1173 = vpop.f32.mrb[0].mxu0
    %v1174 = vadd.f32 0.0, %v1173
    %v1175 = vpop.f32.mrb[0].mxu0
    %v1176 = vadd.f32 0.0, %v1175
    %v1177 = vpop.f32.mrb[0].mxu0
    %v1178 = vpop.f32.mrb[0].mxu0
    %1179 = vdwg.mxu0
    %1180 = vmatprep.subr.bf16.mxu0 %v642
    %1181 = vmatpush1.bf16.msra.mxu0 %v641
    %1182 = vmatprep.subr.bf16.mxu0 %v646
    %1183 = vmatpush1.bf16.msra.mxu0 %v645
    %1184 = vmatprep.subr.bf16.mxu0 %v650
    %1185 = vmatpush1.bf16.msra.mxu0 %v649
    %1186 = vmatprep.subr.bf16.mxu0 %v654
    %1187 = vmatpush1.bf16.msra.mxu0 %v653
    %1188 = vmatprep.subr.bf16.mxu0 %v658
    %1189 = vmatpush1.bf16.msra.mxu0 %v657
    %1190 = vmatprep.subr.bf16.mxu0 %v662
    %1191 = vmatpush1.bf16.msra.mxu0 %v661
    %1192 = vmatprep.subr.bf16.mxu0 %v666
    %1193 = vmatpush1.bf16.msra.mxu0 %v665
    %1194 = vmatprep.subr.bf16.mxu0 %v670
    %1195 = vmatpush1.bf16.msra.mxu0 %v669
    %1196 = vmatprep.subr.bf16.mxu0 0
    %1197 = vmatpush1.bf16.msra.mxu0 0
    %1198 = vmatprep.subr.bf16.mxu0 0
    %1199 = vmatpush1.bf16.msra.mxu0 0
    %1200 = vmatprep.subr.bf16.mxu0 0
    %1201 = vmatpush1.bf16.msra.mxu0 0
    %1202 = vmatprep.subr.bf16.mxu0 0
    %1203 = vmatpush1.bf16.msra.mxu0 0
    %1204 = vmatprep.subr.bf16.mxu0 0
    %1205 = vmatpush1.bf16.msra.mxu0 0
    %1206 = vmatprep.subr.bf16.mxu0 0
    %1207 = vmatpush1.bf16.msra.mxu0 0
    %1208 = vmatprep.subr.bf16.mxu0 0
    %1209 = vmatpush1.bf16.msra.mxu0 0
    %1210 = vmatprep.subr.bf16.mxu0 0
    %1211 = vmatpush1.bf16.msra.mxu0 0
    %1212 = vmatprep.mubr.bf16.mxu0 0
    %1213 = vmatmul.mubr.bf16.gmra.mrb[0].mxu0 %v1138
    %v1214 = vpop.f32.mrb[0].mxu0
    %v1215 = vadd.f32 0.0, %v1214
    %v1216 = vpop.f32.mrb[0].mxu0
    %v1217 = vadd.f32 0.0, %v1216
    %v1218 = vpop.f32.mrb[0].mxu0
    %v1219 = vpop.f32.mrb[0].mxu0
    %1220 = vdwg.mxu0
    %v1221 = vadd.f32 %v1134, %v1174
    %v1222 = vadd.f32 %v1135, %v1176
    %v1223 = vadd.f32 %v1136, %v1215
    %v1224 = vadd.f32 %v1137, %v1217
    %v1225 = vtanh.pop %v1221
    %v1226 = vtanh.pop %v1222
    %v1227 = vtanh.pop %v1223
    %v1228 = vtanh.pop %v1224
    %v1229 = vmul.f32 %v1225, 0.5
    %v1230 = vadd.f32 %v1229, 0.5
    %v1231 = vmul.f32 %v1226, 0.5
    %v1232 = vadd.f32 %v1231, 0.5
    %v1233 = vmul.f32 %v1227, 0.5
    %v1234 = vadd.f32 %v1233, 0.5
    %v1235 = vmul.f32 %v1232, %v1128
    %v1236 = vmul.f32 %v1230, %v1228
    %v1237 = vadd.f32 %v1235, %v1236
    %v1238 = vtanh.pop %v1237
    %v1239 = vmul.f32 %v1234, %v1238
    %s1240 = smul.u32 5, 4
    %s1241 = smul.addr %s1240, 8
    %s1242 = scalar_lea.vmem [#allocation2], %s1241
    %v1243 = vld [vmem:[%s1242] sm:$0xff]
    %v1244 = vld [vmem:[%s1242 + $0x8] sm:$0xff]
    %v1245 = vld [vmem:[%s1242 + $0x10] sm:$0xff]
    %v1246 = vld [vmem:[%s1242 + $0x18] sm:$0xff]
    %v1247 = vpack.c.bf16 %v1239, %v1239
    %1248 = vmatprep.subr.bf16.mxu0 %v640
    %1249 = vmatpush1.bf16.msra.mxu0 %v639
    %1250 = vmatprep.subr.bf16.mxu0 %v644
    %1251 = vmatpush1.bf16.msra.mxu0 %v643
    %1252 = vmatprep.subr.bf16.mxu0 %v648
    %1253 = vmatpush1.bf16.msra.mxu0 %v647
    %1254 = vmatprep.subr.bf16.mxu0 %v652
    %1255 = vmatpush1.bf16.msra.mxu0 %v651
    %1256 = vmatprep.subr.bf16.mxu0 %v656
    %1257 = vmatpush1.bf16.msra.mxu0 %v655
    %1258 = vmatprep.subr.bf16.mxu0 %v660
    %1259 = vmatpush1.bf16.msra.mxu0 %v659
    %1260 = vmatprep.subr.bf16.mxu0 %v664
    %1261 = vmatpush1.bf16.msra.mxu0 %v663
    %1262 = vmatprep.subr.bf16.mxu0 %v668
    %1263 = vmatpush1.bf16.msra.mxu0 %v667
    %1264 = vmatprep.subr.bf16.mxu0 0
    %1265 = vmatpush1.bf16.msra.mxu0 0
    %1266 = vmatprep.subr.bf16.mxu0 0
    %1267 = vmatpush1.bf16.msra.mxu0 0
    %1268 = vmatprep.subr.bf16.mxu0 0
    %1269 = vmatpush1.bf16.msra.mxu0 0
    %1270 = vmatprep.subr.bf16.mxu0 0
    %1271 = vmatpush1.bf16.msra.mxu0 0
    %1272 = vmatprep.subr.bf16.mxu0 0
    %1273 = vmatpush1.bf16.msra.mxu0 0
    %1274 = vmatprep.subr.bf16.mxu0 0
    %1275 = vmatpush1.bf16.msra.mxu0 0
    %1276 = vmatprep.subr.bf16.mxu0 0
    %1277 = vmatpush1.bf16.msra.mxu0 0
    %1278 = vmatprep.subr.bf16.mxu0 0
    %1279 = vmatpush1.bf16.msra.mxu0 0
    %1280 = vmatprep.mubr.bf16.mxu0 0
    %1281 = vmatmul.mubr.bf16.gmra.mrb[0].mxu0 %v1247
    %v1282 = vpop.f32.mrb[0].mxu0
    %v1283 = vadd.f32 0.0, %v1282
    %v1284 = vpop.f32.mrb[0].mxu0
    %v1285 = vadd.f32 0.0, %v1284
    %v1286 = vpop.f32.mrb[0].mxu0
    %v1287 = vpop.f32.mrb[0].mxu0
    %1288 = vdwg.mxu0
    %1289 = vmatprep.subr.bf16.mxu0 %v642
    %1290 = vmatpush1.bf16.msra.mxu0 %v641
    %1291 = vmatprep.subr.bf16.mxu0 %v646
    %1292 = vmatpush1.bf16.msra.mxu0 %v645
    %1293 = vmatprep.subr.bf16.mxu0 %v650
    %1294 = vmatpush1.bf16.msra.mxu0 %v649
    %1295 = vmatprep.subr.bf16.mxu0 %v654
    %1296 = vmatpush1.bf16.msra.mxu0 %v653
    %1297 = vmatprep.subr.bf16.mxu0 %v658
    %1298 = vmatpush1.bf16.msra.mxu0 %v657
    %1299 = vmatprep.subr.bf16.mxu0 %v662
    %1300 = vmatpush1.bf16.msra.mxu0 %v661
    %1301 = vmatprep.subr.bf16.mxu0 %v666
    %1302 = vmatpush1.bf16.msra.mxu0 %v665
    %1303 = vmatprep.subr.bf16.mxu0 %v670
    %1304 = vmatpush1.bf16.msra.mxu0 %v669
    %1305 = vmatprep.subr.bf16.mxu0 0
    %1306 = vmatpush1.bf16.msra.mxu0 0
    %1307 = vmatprep.subr.bf16.mxu0 0
    %1308 = vmatpush1.bf16.msra.mxu0 0
    %1309 = vmatprep.subr.bf16.mxu0 0
    %1310 = vmatpush1.bf16.msra.mxu0 0
    %1311 = vmatprep.subr.bf16.mxu0 0
    %1312 = vmatpush1.bf16.msra.mxu0 0
    %1313 = vmatprep.subr.bf16.mxu0 0
    %1314 = vmatpush1.bf16.msra.mxu0 0
    %1315 = vmatprep.subr.bf16.mxu0 0
    %1316 = vmatpush1.bf16.msra.mxu0 0
    %1317 = vmatprep.subr.bf16.mxu0 0
    %1318 = vmatpush1.bf16.msra.mxu0 0
    %1319 = vmatprep.subr.bf16.mxu0 0
    %1320 = vmatpush1.bf16.msra.mxu0 0
    %1321 = vmatprep.mubr.bf16.mxu0 0
    %1322 = vmatmul.mubr.bf16.gmra.mrb[0].mxu0 %v1247
    %v1323 = vpop.f32.mrb[0].mxu0
    %v1324 = vadd.f32 0.0, %v1323
    %v1325 = vpop.f32.mrb[0].mxu0
    %v1326 = vadd.f32 0.0, %v1325
    %v1327 = vpop.f32.mrb[0].mxu0
    %v1328 = vpop.f32.mrb[0].mxu0
    %1329 = vdwg.mxu0
    %v1330 = vadd.f32 %v1243, %v1283
    %v1331 = vadd.f32 %v1244, %v1285
    %v1332 = vadd.f32 %v1245, %v1324
    %v1333 = vadd.f32 %v1246, %v1326
    %v1334 = vtanh.pop %v1330
    %v1335 = vtanh.pop %v1331
    %v1336 = vtanh.pop %v1332
    %v1337 = vtanh.pop %v1333
    %v1338 = vmul.f32 %v1334, 0.5
    %v1339 = vadd.f32 %v1338, 0.5
    %v1340 = vmul.f32 %v1335, 0.5
    %v1341 = vadd.f32 %v1340, 0.5
    %v1342 = vmul.f32 %v1336, 0.5
    %v1343 = vadd.f32 %v1342, 0.5
    %v1344 = vmul.f32 %v1341, %v1237
    %v1345 = vmul.f32 %v1339, %v1337
    %v1346 = vadd.f32 %v1344, %v1345
    %v1347 = vtanh.pop %v1346
    %v1348 = vmul.f32 %v1343, %v1347
    %s1349 = smul.u32 6, 4
    %s1350 = smul.addr %s1349, 8
    %s1351 = scalar_lea.vmem [#allocation2], %s1350
    %v1352 = vld [vmem:[%s1351] sm:$0xff]
    %v1353 = vld [vmem:[%s1351 + $0x8] sm:$0xff]
    %v1354 = vld [vmem:[%s1351 + $0x10] sm:$0xff]
    %v1355 = vld [vmem:[%s1351 + $0x18] sm:$0xff]
    %v1356 = vpack.c.bf16 %v1348, %v1348
    %1357 = vmatprep.subr.bf16.mxu0 %v640
    %1358 = vmatpush1.bf16.msra.mxu0 %v639
    %1359 = vmatprep.subr.bf16.mxu0 %v644
    %1360 = vmatpush1.bf16.msra.mxu0 %v643
    %1361 = vmatprep.subr.bf16.mxu0 %v648
    %1362 = vmatpush1.bf16.msra.mxu0 %v647
    %1363 = vmatprep.subr.bf16.mxu0 %v652
    %1364 = vmatpush1.bf16.msra.mxu0 %v651
    %1365 = vmatprep.subr.bf16.mxu0 %v656
    %1366 = vmatpush1.bf16.msra.mxu0 %v655
    %1367 = vmatprep.subr.bf16.mxu0 %v660
    %1368 = vmatpush1.bf16.msra.mxu0 %v659
    %1369 = vmatprep.subr.bf16.mxu0 %v664
    %1370 = vmatpush1.bf16.msra.mxu0 %v663
    %1371 = vmatprep.subr.bf16.mxu0 %v668
    %1372 = vmatpush1.bf16.msra.mxu0 %v667
    %1373 = vmatprep.subr.bf16.mxu0 0
    %1374 = vmatpush1.bf16.msra.mxu0 0
    %1375 = vmatprep.subr.bf16.mxu0 0
    %1376 = vmatpush1.bf16.msra.mxu0 0
    %1377 = vmatprep.subr.bf16.mxu0 0
    %1378 = vmatpush1.bf16.msra.mxu0 0
    %1379 = vmatprep.subr.bf16.mxu0 0
    %1380 = vmatpush1.bf16.msra.mxu0 0
    %1381 = vmatprep.subr.bf16.mxu0 0
    %1382 = vmatpush1.bf16.msra.mxu0 0
    %1383 = vmatprep.subr.bf16.mxu0 0
    %1384 = vmatpush1.bf16.msra.mxu0 0
    %1385 = vmatprep.subr.bf16.mxu0 0
    %1386 = vmatpush1.bf16.msra.mxu0 0
    %1387 = vmatprep.subr.bf16.mxu0 0
    %1388 = vmatpush1.bf16.msra.mxu0 0
    %1389 = vmatprep.mubr.bf16.mxu0 0
    %1390 = vmatmul.mubr.bf16.gmra.mrb[0].mxu0 %v1356
    %v1391 = vpop.f32.mrb[0].mxu0
    %v1392 = vadd.f32 0.0, %v1391
    %v1393 = vpop.f32.mrb[0].mxu0
    %v1394 = vadd.f32 0.0, %v1393
    %v1395 = vpop.f32.mrb[0].mxu0
    %v1396 = vpop.f32.mrb[0].mxu0
    %1397 = vdwg.mxu0
    %1398 = vmatprep.subr.bf16.mxu0 %v642
    %1399 = vmatpush1.bf16.msra.mxu0 %v641
    %1400 = vmatprep.subr.bf16.mxu0 %v646
    %1401 = vmatpush1.bf16.msra.mxu0 %v645
    %1402 = vmatprep.subr.bf16.mxu0 %v650
    %1403 = vmatpush1.bf16.msra.mxu0 %v649
    %1404 = vmatprep.subr.bf16.mxu0 %v654
    %1405 = vmatpush1.bf16.msra.mxu0 %v653
    %1406 = vmatprep.subr.bf16.mxu0 %v658
    %1407 = vmatpush1.bf16.msra.mxu0 %v657
    %1408 = vmatprep.subr.bf16.mxu0 %v662
    %1409 = vmatpush1.bf16.msra.mxu0 %v661
    %1410 = vmatprep.subr.bf16.mxu0 %v666
    %1411 = vmatpush1.bf16.msra.mxu0 %v665
    %1412 = vmatprep.subr.bf16.mxu0 %v670
    %1413 = vmatpush1.bf16.msra.mxu0 %v669
    %1414 = vmatprep.subr.bf16.mxu0 0
    %1415 = vmatpush1.bf16.msra.mxu0 0
    %1416 = vmatprep.subr.bf16.mxu0 0
    %1417 = vmatpush1.bf16.msra.mxu0 0
    %1418 = vmatprep.subr.bf16.mxu0 0
    %1419 = vmatpush1.bf16.msra.mxu0 0
    %1420 = vmatprep.subr.bf16.mxu0 0
    %1421 = vmatpush1.bf16.msra.mxu0 0
    %1422 = vmatprep.subr.bf16.mxu0 0
    %1423 = vmatpush1.bf16.msra.mxu0 0
    %1424 = vmatprep.subr.bf16.mxu0 0
    %1425 = vmatpush1.bf16.msra.mxu0 0
    %1426 = vmatprep.subr.bf16.mxu0 0
    %1427 = vmatpush1.bf16.msra.mxu0 0
    %1428 = vmatprep.subr.bf16.mxu0 0
    %1429 = vmatpush1.bf16.msra.mxu0 0
    %1430 = vmatprep.mubr.bf16.mxu0 0
    %1431 = vmatmul.mubr.bf16.gmra.mrb[0].mxu0 %v1356
    %v1432 = vpop.f32.mrb[0].mxu0
    %v1433 = vadd.f32 0.0, %v1432
    %v1434 = vpop.f32.mrb[0].mxu0
    %v1435 = vadd.f32 0.0, %v1434
    %v1436 = vpop.f32.mrb[0].mxu0
    %v1437 = vpop.f32.mrb[0].mxu0
    %1438 = vdwg.mxu0
    %v1439 = vadd.f32 %v1352, %v1392
    %v1440 = vadd.f32 %v1353, %v1394
    %v1441 = vadd.f32 %v1354, %v1433
    %v1442 = vadd.f32 %v1355, %v1435
    %v1443 = vtanh.pop %v1439
    %v1444 = vtanh.pop %v1440
    %v1445 = vtanh.pop %v1441
    %v1446 = vtanh.pop %v1442
    %v1447 = vmul.f32 %v1443, 0.5
    %v1448 = vadd.f32 %v1447, 0.5
    %v1449 = vmul.f32 %v1444, 0.5
    %v1450 = vadd.f32 %v1449, 0.5
    %v1451 = vmul.f32 %v1445, 0.5
    %v1452 = vadd.f32 %v1451, 0.5
    %v1453 = vmul.f32 %v1450, %v1346
    %v1454 = vmul.f32 %v1448, %v1446
    %v1455 = vadd.f32 %v1453, %v1454
    %v1456 = vtanh.pop %v1455
    %v1457 = vmul.f32 %v1452, %v1456
    %s1458 = smul.u32 7, 4
    %s1459 = smul.addr %s1458, 8
    %s1460 = scalar_lea.vmem [#allocation2], %s1459
    %v1461 = vld [vmem:[%s1460] sm:$0xff]
    %v1462 = vld [vmem:[%s1460 + $0x8] sm:$0xff]
    %v1463 = vld [vmem:[%s1460 + $0x10] sm:$0xff]
    %v1464 = vld [vmem:[%s1460 + $0x18] sm:$0xff]
    %v1465 = vpack.c.bf16 %v1457, %v1457
    %1466 = vmatprep.subr.bf16.mxu0 %v640
    %1467 = vmatpush1.bf16.msra.mxu0 %v639
    %1468 = vmatprep.subr.bf16.mxu0 %v644
    %1469 = vmatpush1.bf16.msra.mxu0 %v643
    %1470 = vmatprep.subr.bf16.mxu0 %v648
    %1471 = vmatpush1.bf16.msra.mxu0 %v647
    %1472 = vmatprep.subr.bf16.mxu0 %v652
    %1473 = vmatpush1.bf16.msra.mxu0 %v651
    %1474 = vmatprep.subr.bf16.mxu0 %v656
    %1475 = vmatpush1.bf16.msra.mxu0 %v655
    %1476 = vmatprep.subr.bf16.mxu0 %v660
    %1477 = vmatpush1.bf16.msra.mxu0 %v659
    %1478 = vmatprep.subr.bf16.mxu0 %v664
    %1479 = vmatpush1.bf16.msra.mxu0 %v663
    %1480 = vmatprep.subr.bf16.mxu0 %v668
    %1481 = vmatpush1.bf16.msra.mxu0 %v667
    %1482 = vmatprep.subr.bf16.mxu0 0
    %1483 = vmatpush1.bf16.msra.mxu0 0
    %1484 = vmatprep.subr.bf16.mxu0 0
    %1485 = vmatpush1.bf16.msra.mxu0 0
    %1486 = vmatprep.subr.bf16.mxu0 0
    %1487 = vmatpush1.bf16.msra.mxu0 0
    %1488 = vmatprep.subr.bf16.mxu0 0
    %1489 = vmatpush1.bf16.msra.mxu0 0
    %1490 = vmatprep.subr.bf16.mxu0 0
    %1491 = vmatpush1.bf16.msra.mxu0 0
    %1492 = vmatprep.subr.bf16.mxu0 0
    %1493 = vmatpush1.bf16.msra.mxu0 0
    %1494 = vmatprep.subr.bf16.mxu0 0
    %1495 = vmatpush1.bf16.msra.mxu0 0
    %1496 = vmatprep.subr.bf16.mxu0 0
    %1497 = vmatpush1.bf16.msra.mxu0 0
    %1498 = vmatprep.mubr.bf16.mxu0 0
    %1499 = vmatmul.mubr.bf16.gmra.mrb[0].mxu0 %v1465
    %v1500 = vpop.f32.mrb[0].mxu0
    %v1501 = vadd.f32 0.0, %v1500
    %v1502 = vpop.f32.mrb[0].mxu0
    %v1503 = vadd.f32 0.0, %v1502
    %v1504 = vpop.f32.mrb[0].mxu0
    %v1505 = vpop.f32.mrb[0].mxu0
    %1506 = vdwg.mxu0
    %1507 = vmatprep.subr.bf16.mxu0 %v642
    %1508 = vmatpush1.bf16.msra.mxu0 %v641
    %1509 = vmatprep.subr.bf16.mxu0 %v646
    %1510 = vmatpush1.bf16.msra.mxu0 %v645
    %1511 = vmatprep.subr.bf16.mxu0 %v650
    %1512 = vmatpush1.bf16.msra.mxu0 %v649
    %1513 = vmatprep.subr.bf16.mxu0 %v654
    %1514 = vmatpush1.bf16.msra.mxu0 %v653
    %1515 = vmatprep.subr.bf16.mxu0 %v658
    %1516 = vmatpush1.bf16.msra.mxu0 %v657
    %1517 = vmatprep.subr.bf16.mxu0 %v662
    %1518 = vmatpush1.bf16.msra.mxu0 %v661
    %1519 = vmatprep.subr.bf16.mxu0 %v666
    %1520 = vmatpush1.bf16.msra.mxu0 %v665
    %1521 = vmatprep.subr.bf16.mxu0 %v670
    %1522 = vmatpush1.bf16.msra.mxu0 %v669
    %1523 = vmatprep.subr.bf16.mxu0 0
    %1524 = vmatpush1.bf16.msra.mxu0 0
    %1525 = vmatprep.subr.bf16.mxu0 0
    %1526 = vmatpush1.bf16.msra.mxu0 0
    %1527 = vmatprep.subr.bf16.mxu0 0
    %1528 = vmatpush1.bf16.msra.mxu0 0
    %1529 = vmatprep.subr.bf16.mxu0 0
    %1530 = vmatpush1.bf16.msra.mxu0 0
    %1531 = vmatprep.subr.bf16.mxu0 0
    %1532 = vmatpush1.bf16.msra.mxu0 0
    %1533 = vmatprep.subr.bf16.mxu0 0
    %1534 = vmatpush1.bf16.msra.mxu0 0
    %1535 = vmatprep.subr.bf16.mxu0 0
    %1536 = vmatpush1.bf16.msra.mxu0 0
    %1537 = vmatprep.subr.bf16.mxu0 0
    %1538 = vmatpush1.bf16.msra.mxu0 0
    %1539 = vmatprep.mubr.bf16.mxu0 0
    %1540 = vmatmul.mubr.bf16.gmra.mrb[0].mxu0 %v1465
    %v1541 = vpop.f32.mrb[0].mxu0
    %v1542 = vadd.f32 0.0, %v1541
    %v1543 = vpop.f32.mrb[0].mxu0
    %v1544 = vadd.f32 0.0, %v1543
    %v1545 = vpop.f32.mrb[0].mxu0
    %v1546 = vpop.f32.mrb[0].mxu0
    %1547 = vdwg.mxu0
    %v1548 = vadd.f32 %v1461, %v1501
    %v1549 = vadd.f32 %v1462, %v1503
    %v1550 = vadd.f32 %v1463, %v1542
    %v1551 = vadd.f32 %v1464, %v1544
    %v1552 = vtanh.pop %v1548
    %v1553 = vtanh.pop %v1549
    %v1554 = vtanh.pop %v1550
    %v1555 = vtanh.pop %v1551
    %v1556 = vmul.f32 %v1552, 0.5
    %v1557 = vadd.f32 %v1556, 0.5
    %v1558 = vmul.f32 %v1553, 0.5
    %v1559 = vadd.f32 %v1558, 0.5
    %v1560 = vmul.f32 %v1554, 0.5
    %v1561 = vadd.f32 %v1560, 0.5
    %v1562 = vmul.f32 %v1559, %v1455
    %v1563 = vmul.f32 %v1557, %v1555
    %v1564 = vadd.f32 %v1562, %v1563
    %v1565 = vtanh.pop %v1564
    %v1566 = vmul.f32 %v1561, %v1565
    %v1567 = vpack.c.bf16 %v1566, %v1566
    %v1568 = vld [vmem:[#allocation9] sm:$0xf]
    %v1569 = vld [vmem:[#allocation9 + $0x4] sm:$0xf]
    %v1570 = vld [vmem:[#allocation9 + $0x8] sm:$0xf]
    %v1571 = vld [vmem:[#allocation9 + $0xc] sm:$0xf]
    %v1572 = vld [vmem:[#allocation9 + $0x10] sm:$0xf]
    %v1573 = vld [vmem:[#allocation9 + $0x14] sm:$0xf]
    %v1574 = vld [vmem:[#allocation9 + $0x18] sm:$0xf]
    %v1575 = vld [vmem:[#allocation9 + $0x1c] sm:$0xf]
    %v1576 = vld [vmem:[#allocation9 + $0x20] sm:$0xf]
    %v1577 = vld [vmem:[#allocation9 + $0x24] sm:$0xf]
    %v1578 = vld [vmem:[#allocation9 + $0x28] sm:$0xf]
    %v1579 = vld [vmem:[#allocation9 + $0x2c] sm:$0xf]
    %v1580 = vld [vmem:[#allocation9 + $0x30] sm:$0xf]
    %v1581 = vld [vmem:[#allocation9 + $0x34] sm:$0xf]
    %v1582 = vld [vmem:[#allocation9 + $0x38] sm:$0xf]
    %v1583 = vld [vmem:[#allocation9 + $0x3c] sm:$0xf]
    %v1584 = vld [vmem:[%s5] sm:$0x1]
    %v1586 = vlaneseq
    %v1587 = vshrl.u32 %v1586, 7
    %v1588 = vsub.s32 0, %v1587
    %v1589 = vrot.slane %v1584, %v1588
    %v1607 = vunpack.c.l.b16 %v1568
    %v1608 = vunpack.c.l.b16 %v1569
    %v1609 = vunpack.c.l.b16 %v1570
    %v1610 = vunpack.c.l.b16 %v1571
    %v1611 = vunpack.c.l.b16 %v1572
    %v1612 = vunpack.c.l.b16 %v1573
    %v1613 = vunpack.c.l.b16 %v1574
    %v1614 = vunpack.c.l.b16 %v1575
    %v1615 = vunpack.c.l.b16 %v1576
    %v1616 = vunpack.c.l.b16 %v1577
    %v1617 = vunpack.c.l.b16 %v1578
    %v1618 = vunpack.c.l.b16 %v1579
    %v1619 = vunpack.c.l.b16 %v1580
    %v1620 = vunpack.c.l.b16 %v1581
    %v1621 = vunpack.c.l.b16 %v1582
    %v1622 = vunpack.c.l.b16 %v1583
    %v1623 = vpack.c.b16 %v1608, %v1607
    %v1624 = vpack.c.b16 %v1610, %v1609
    %v1625 = vpack.c.b16 %v1612, %v1611
    %v1626 = vpack.c.b16 %v1614, %v1613
    %v1627 = vpack.c.b16 %v1616, %v1615
    %v1628 = vpack.c.b16 %v1618, %v1617
    %v1629 = vpack.c.b16 %v1620, %v1619
    %v1630 = vpack.c.b16 %v1622, %v1621
    %1639 = vmatprep.subr.bf16.mxu0 0
    %1640 = vmatpush1.bf16.msra.mxu0 %v1623
    %1641 = vmatprep.subr.bf16.mxu0 0
    %1642 = vmatpush1.bf16.msra.mxu0 %v1624
    %1643 = vmatprep.subr.bf16.mxu0 0
    %1644 = vmatpush1.bf16.msra.mxu0 %v1625
    %1645 = vmatprep.subr.bf16.mxu0 0
    %1646 = vmatpush1.bf16.msra.mxu0 %v1626
    %1647 = vmatprep.subr.bf16.mxu0 0
    %1648 = vmatpush1.bf16.msra.mxu0 %v1627
    %1649 = vmatprep.subr.bf16.mxu0 0
    %1650 = vmatpush1.bf16.msra.mxu0 %v1628
    %1651 = vmatprep.subr.bf16.mxu0 0
    %1652 = vmatpush1.bf16.msra.mxu0 %v1629
    %1653 = vmatprep.subr.bf16.mxu0 0
    %1654 = vmatpush1.bf16.msra.mxu0 %v1630
    %1655 = vmatprep.subr.bf16.mxu0 0
    %1656 = vmatpush1.bf16.msra.mxu0 0
    %1657 = vmatprep.subr.bf16.mxu0 0
    %1658 = vmatpush1.bf16.msra.mxu0 0
    %1659 = vmatprep.subr.bf16.mxu0 0
    %1660 = vmatpush1.bf16.msra.mxu0 0
    %1661 = vmatprep.subr.bf16.mxu0 0
    %1662 = vmatpush1.bf16.msra.mxu0 0
    %1663 = vmatprep.subr.bf16.mxu0 0
    %1664 = vmatpush1.bf16.msra.mxu0 0
    %1665 = vmatprep.subr.bf16.mxu0 0
    %1666 = vmatpush1.bf16.msra.mxu0 0
    %1667 = vmatprep.subr.bf16.mxu0 0
    %1668 = vmatpush1.bf16.msra.mxu0 0
    %1669 = vmatprep.subr.bf16.mxu0 0
    %1670 = vmatpush1.bf16.msra.mxu0 0
    %1671 = vmatprep.mubr.bf16.mxu0 0
    %1672 = vmatmul.mubr.bf16.gmra.mrb[0].mxu0 %v1567
    %v1673 = vpop.f32.mrb[0].mxu0
    %v1674 = vadd.f32 %v1589, %v1673
    %v1675 = vpop.f32.mrb[0].mxu0
    %v1676 = vpop.f32.mrb[0].mxu0
    %v1677 = vpop.f32.mrb[0].mxu0
    %1678 = vdwg.mxu0
    %1679 = vst [vmem:[#allocation11] sm:$0xff] %v1674
    // Predicated region
    $region42: #{tpu_custom_call.1} parent=1 // pred_check
      _
    $region43: #{tpu_custom_call.1} parent=1 // pred_check_branch
      %1681 = sbr.rel (0) target = $region45
    $region44: #{tpu_custom_call.1} parent=1 // pred_region
      %s1683 = ssub.s32 128, 128
      %1684 = vsyncadd [#allocation5], %s1683
      %s1686 = sshll.u32 [#allocation11], 4
      %s1687 = int_to_ptr.vmem [resolvable:$true] %s1686
      %1689 = dma.vmem_to_hbm [thread:$0]  %s1687, 128, %s6, [#allocation5]
    $region45: #{tpu_custom_call.1} parent=1 // pred_fallthru
      _
    // Predicated region
    $region46: #{tpu_custom_call.1} parent=1 // pred_check
      _
    $region47: #{tpu_custom_call.1} parent=1 // pred_check_branch
      %1691 = sbr.rel (0) target = $region49
    $region48: #{tpu_custom_call.1} parent=1 // pred_region
      %1692 = dma.done [#allocation5], 128
    $region49: #{tpu_custom_call.1} parent=1 // pred_fallthru
      _
    %1693 = vsyncpa [#allocation4], 1
    %1694 = vsyncpa [#allocation7], 1
    %1695 = vsyncpa [#allocation10], 1
    %1696 = vsyncpa [#allocation5], 1

</llo_original>
